<compile_context>
chip_gen: v5e
topology: v5e:2x2
jax: 0.10.0
libtpu: 0.0.40
codegen_flags: <defaults>
</compile_context>

<pallas_src>
import math
from functools import partial

import numpy as np
import jax
import jax.numpy as jnp
from jax.experimental import pallas as pl
from jax.experimental.pallas import tpu as pltpu


# ----------------------------------------------------------------------------
# Glue (plain JAX): LIIF nearest-feature lookup + relative coord/cell (transposed)
# ----------------------------------------------------------------------------

def _make_coord_1d(n):
    # pixel-center coordinates in [-1, 1] (LIIF's make_coord)
    r = 1.0 / n
    return -1.0 + r + 2.0 * r * jnp.arange(n, dtype=jnp.float32)


def convert_liif_feat_coord_cell_t(z_dec, coord, cell, feat_dtype=jnp.bfloat16):
    """z_dec: (B, C, Hf, Wf); coord/cell: (B, h, w, 2) with (y, x) in [-1, 1].

    Returns channel-major tensors ready for the kernel:
      q_feat_t (B, C, Q) feat_dtype, rel_coord_t (B, 2, Q) f32, rel_cell_t (B, 2, Q) f32.
    """
    B, C, Hf, Wf = z_dec.shape
    q_shape = coord.shape[1:-1]
    coord_f = coord.reshape(B, -1, 2).astype(jnp.float32)
    cell_f = cell.reshape(B, -1, 2).astype(jnp.float32)

    # F.grid_sample(mode='nearest', align_corners=False) index math.
    # TODO(synk): jnp.round is round-half-to-even; torch grid_sample may pick the other
    #             texel exactly at .5 boundaries (one-pixel edge-case mismatch).
    y = coord_f[..., 0]
    x = coord_f[..., 1]
    iy = jnp.clip(jnp.round((y + 1.0) * Hf / 2.0 - 0.5).astype(jnp.int32), 0, Hf - 1)
    ix = jnp.clip(jnp.round((x + 1.0) * Wf / 2.0 - 0.5).astype(jnp.int32), 0, Wf - 1)
    idx = iy * Wf + ix                                                   # (B, Q)

    # TODO(synk): the data-dependent gather stays in XLA; an in-kernel one-hot matmul
    #             gather only pays off once C / the upscale factor is much larger.
    feat_flat = z_dec.astype(feat_dtype).reshape(B, C, Hf * Wf)          # (B, C, HW)
    q_feat_t = jnp.take_along_axis(feat_flat, idx[:, None, :], axis=2)   # (B, C, Q)

    qy = _make_coord_1d(Hf)[iy]                                          # (B, Q)
    qx = _make_coord_1d(Wf)[ix]
    rel_coord_t = jnp.stack([(y - qy) * Hf, (x - qx) * Wf], axis=1)      # (B, 2, Q)
    rel_cell_t = jnp.stack([cell_f[..., 0] * Hf, cell_f[..., 1] * Wf], axis=1)
    return q_feat_t, rel_coord_t, rel_cell_t, q_shape


def convert_posenc(x, dim, w_max):
    """Reference posenc (host JAX, f32): (..., 2) -> (..., 2*dim)."""
    w = jnp.exp(jnp.linspace(0.0, math.log(w_max), dim // 2)).astype(jnp.float32)
    proj = (x[..., None] * w).reshape(*x.shape[:-1], -1)
    return jnp.concatenate([jnp.cos(math.pi * proj), jnp.sin(math.pi * proj)], axis=-1)


def _posenc_consts(dim, w_max):
    """(2*dim, 3) rows [a, b, phase] with posenc(y, x)[j] == cos(a[j]*y + b[j]*x - p[j])."""
    half = dim // 2
    w = np.exp(np.linspace(0.0, math.log(w_max), half, dtype=np.float32)).astype(np.float32)
    a = np.zeros(2 * dim, np.float32)
    b = np.zeros(2 * dim, np.float32)
    p = np.zeros(2 * dim, np.float32)
    for j in range(2 * dim):
        base = j % dim
        k = base if base < half else base - half
        coef = math.pi * float(w[k])
        if base < half:
            a[j] = coef            # multiplies the y component
        else:
            b[j] = coef            # multiplies the x component
        p[j] = 0.0 if j < dim else math.pi / 2.0     # sin(t) == cos(t - pi/2)
    return np.stack([a, b, p], axis=1)               # (2*dim, 3)


# ----------------------------------------------------------------------------
# Fused Pallas kernel: transposed MLP, in-kernel posenc, single fused layer-0 dot
# ----------------------------------------------------------------------------

def _make_liif_net_kernel(use_co_pe, use_ce_pe, c_feat, d_co, d_ce):
    def kernel(qf_ref, rco_ref, rce_ref, cco_ref, cce_ref,
               w0t_ref, b0_ref, w1t_ref, b1_ref, w2t_ref, b2_ref,
               o_ref, xcat_ref):
        # ---- build the (in_ch, T) concat scratch along the contraction dim --------
        xcat_ref[0:c_feat, :] = qf_ref[0]                        # (C, T) bf16

        rco = rco_ref[0]                                         # (2, T) f32
        if use_co_pe:
            a = cco_ref[:, 0:1]                                  # (d_co, 1) f32
            b = cco_ref[:, 1:2]
            p = cco_ref[:, 2:3]
            # posenc argument math + cos stay f32 (phase reaches ~+/-400 rad).
            enc_co = jnp.cos(a * rco[0:1, :] + b * rco[1:2, :] - p)   # (d_co, T)
        else:
            enc_co = rco
        xcat_ref[c_feat:c_feat + d_co, :] = enc_co.astype(xcat_ref.dtype)

        rce = rce_ref[0]                                         # (2, T) f32
        if use_ce_pe:
            a = cce_ref[:, 0:1]
            b = cce_ref[:, 1:2]
            p = cce_ref[:, 2:3]
            enc_ce = jnp.cos(a * rce[0:1, :] + b * rce[1:2, :] - p)   # (d_ce, T)
        else:
            enc_ce = rce
        xcat_ref[c_feat + d_co:c_feat + d_co + d_ce, :] = enc_ce.astype(xcat_ref.dtype)

        # ---- layer 0: one fused dot, f32 accumulation, N = tile (lane-dense) ------
        acc = jnp.dot(w0t_ref[...], xcat_ref[...],
                      preferred_element_type=jnp.float32)        # (hidden, T)
        h = jnp.maximum(acc + b0_ref[...], 0.0)

        # ---- layer 1 ---------------------------------------------------------------
        h = jnp.dot(w1t_ref[...], h.astype(w1t_ref.dtype),
                    preferred_element_type=jnp.float32) + b1_ref[...]
        h = jnp.maximum(h, 0.0)

        # ---- layer 2: (C_out, T) block -> lane-dense NC(HW) store ------------------
        o = jnp.dot(w2t_ref[...], h.astype(w2t_ref.dtype),
                    preferred_element_type=jnp.float32) + b2_ref[...]
        o_ref[0] = o.astype(o_ref.dtype)

    return kernel


_TILE_CANDIDATES = (8192, 4096, 2048, 1024, 512, 256, 128)


def _pick_tile(q, max_tile, batch):
    """Largest 128-multiple tile (<= cap) dividing q; pad minimally otherwise.

    When batch == 1, cap the tile so the grid has >= 2 cells (v7x dual TensorCore).
    """
    cap = max_tile
    if batch < 2 and q > 128:
        cap = min(cap, max(128, ((q // 2) // 128) * 128))
    for t in _TILE_CANDIDATES:
        if t <= cap and q % t == 0:
            return t, q
    qp = ((q + 127) // 128) * 128
    for t in _TILE_CANDIDATES:
        if t <= cap and qp % t == 0:
            return t, qp
    return 128, qp


def _vmem_bytes_estimate(tile, c_feat, in_ch, c_out):
    pad8 = lambda n: ((n + 7) // 8) * 8
    pad16 = lambda n: ((n + 15) // 16) * 16
    in_bytes = pad16(c_feat) * tile * 2 + 2 * pad8(2) * tile * 4     # q_feat + rel_* blocks
    out_bytes = pad8(c_out) * tile * 4
    scratch = pad16(in_ch) * tile * 2
    return 2 * (in_bytes + out_bytes) + scratch + (1 << 20)          # double-buffer + slack


def liif_net_pallas(q_feat_t, rel_coord_t, rel_cell_t, kparams, pe_consts,
                    use_co_pe, use_ce_pe, max_tile_rows=8192):
    """q_feat_t: (B, C, Q) bf16; rel_*_t: (B, 2, Q) f32 -> (B, C_out, Q) f32 (NC(HW))."""
    w0t, b0t, w1t, b1t, w2t, b2t = kparams
    cco, cce = pe_consts
    B, C, Q = q_feat_t.shape
    hidden, in_ch = w0t.shape
    c_out = w2t.shape[0]
    d_co = cco.shape[0] if use_co_pe else 2
    d_ce = cce.shape[0] if use_ce_pe else 2
    assert C + d_co + d_ce == in_ch, (C, d_co, d_ce, in_ch)

    tile, q_pad = _pick_tile(Q, max_tile_rows, B)
    if q_pad != Q:
        # TODO(synk): replace this HBM pad with an in-kernel masked ragged last tile.
        pad = ((0, 0), (0, 0), (0, q_pad - Q))
        q_feat_t = jnp.pad(q_feat_t, pad)
        rel_coord_t = jnp.pad(rel_coord_t, pad)
        rel_cell_t = jnp.pad(rel_cell_t, pad)
    n_tiles = q_pad // tile

    full = lambda b, t: (0, 0)   # resident weight / constant blocks

    flops = 2 * B * q_pad * (in_ch * hidden + hidden * hidden + hidden * c_out)
    transc = B * q_pad * ((d_co if use_co_pe else 0) + (d_ce if use_ce_pe else 0))
    weight_bytes = sum(int(a.size) * a.dtype.itemsize
                       for a in (w0t, b0t, w1t, b1t, w2t, b2t, cco, cce))
    bytes_acc = B * q_pad * (C * 2 + 2 * 4 + 2 * 4 + c_out * 4) + weight_bytes
    cost = pl.CostEstimate(flops=int(flops), transcendentals=int(transc),
                           bytes_accessed=int(bytes_acc))

    est = _vmem_bytes_estimate(tile, C, in_ch, c_out)
    cp_kwargs = dict(dimension_semantics=("parallel", "parallel"))
    if est > 28 * (1 << 20):
        cp_kwargs["vmem_limit_bytes"] = int(min(2 * est, 100 * (1 << 20)))

    out = pl.pallas_call(
        _make_liif_net_kernel(use_co_pe, use_ce_pe, C, d_co, d_ce),
        out_shape=jax.ShapeDtypeStruct((B, c_out, q_pad), jnp.float32),
        grid_spec=pltpu.PrefetchScalarGridSpec(
            num_scalar_prefetch=0,
            grid=(B, n_tiles),
            in_specs=[
                pl.BlockSpec((1, C, tile), lambda b, t: (b, 0, t)),   # q_feat (bf16)
                pl.BlockSpec((1, 2, tile), lambda b, t: (b, 0, t)),   # rel_coord (f32)
                pl.BlockSpec((1, 2, tile), lambda b, t: (b, 0, t)),   # rel_cell  (f32)
                pl.BlockSpec(cco.shape, full),                        # posenc consts (coord)
                pl.BlockSpec(cce.shape, full),                        # posenc consts (cell)
                pl.BlockSpec(w0t.shape, full),
                pl.BlockSpec(b0t.shape, full),
                pl.BlockSpec(w1t.shape, full),
                pl.BlockSpec(b1t.shape, full),
                pl.BlockSpec(w2t.shape, full),
                pl.BlockSpec(b2t.shape, full),
            ],
            out_specs=pl.BlockSpec((1, c_out, tile), lambda b, t: (b, 0, t)),
            scratch_shapes=[pltpu.VMEM((in_ch, tile), jnp.bfloat16)],
        ),
        compiler_params=pltpu.CompilerParams(**cp_kwargs),
        cost_estimate=cost,
    )(q_feat_t, rel_coord_t, rel_cell_t, cco, cce,
      w0t, b0t, w1t, b1t, w2t, b2t)

    if q_pad != Q:
        out = out[:, :, :Q]
    return out


# ----------------------------------------------------------------------------
# LIIF module (JAX)
# ----------------------------------------------------------------------------

@partial(jax.jit, static_argnames=("use_co_pe", "use_ce_pe"))
def _liif_forward(z_dec, coord, cell, kparams, pe_consts, use_co_pe, use_ce_pe):
    q_feat_t, rel_coord_t, rel_cell_t, q_shape = convert_liif_feat_coord_cell_t(
        z_dec, coord, cell)
    out = liif_net_pallas(q_feat_t, rel_coord_t, rel_cell_t,
                          kparams, pe_consts, use_co_pe, use_ce_pe)
    B, c_out, _ = out.shape
    return out.reshape(B, c_out, *q_shape)      # already NCHW -> no permute needed


class LIIF:
    def __init__(self, key, z_dec_channels, hidden=64, out_channels=3,
                 co_pe_dim=8, co_pe_w_max=128.0, ce_pe_dim=8, ce_pe_w_max=128.0,
                 x_channels=None):
        self.co_pe_dim = co_pe_dim
        self.co_pe_w_max = co_pe_w_max
        self.ce_pe_dim = ce_pe_dim
        self.ce_pe_w_max = ce_pe_w_max
        # TODO(synk): x_channels contributes to in_channels in the reference spec but
        #             its forward never concatenates x; the path is not wired here either.
        self.x_channels = x_channels
        self.out_channels = out_channels

        d_co = 2 if co_pe_dim is None else 2 * co_pe_dim
        d_ce = 2 if ce_pe_dim is None else 2 * ce_pe_dim
        C = z_dec_channels
        in_ch = C + d_co + d_ce
        self.in_ch = in_ch

        ks = jax.random.split(key, 6)

        def init_w(k, shape):
            return (jax.random.normal(k, shape, jnp.float32) / jnp.sqrt(shape[0])).astype(jnp.float32)

        w0 = init_w(ks[0], (in_ch, hidden))
        b0 = 0.01 * jax.random.normal(ks[1], (1, hidden), jnp.float32)
        w1 = init_w(ks[2], (hidden, hidden))
        b1 = 0.01 * jax.random.normal(ks[3], (1, hidden), jnp.float32)
        w2 = init_w(ks[4], (hidden, out_channels))
        b2 = 0.01 * jax.random.normal(ks[5], (1, out_channels), jnp.float32)
        self.params = (w0, b0, w1, b1, w2, b2)                  # f32 masters (reference)

        # Kernel-layout params: all weights transposed (channels on sublanes), bf16 MXU
        # operands; biases as (n, 1) f32 columns broadcasting across the lane (pixel) dim.
        self.kparams = (
            jnp.transpose(w0).astype(jnp.bfloat16),             # (hidden, in_ch)
            jnp.reshape(b0, (hidden, 1)),                       # (hidden, 1)  f32
            jnp.transpose(w1).astype(jnp.bfloat16),             # (hidden, hidden)
            jnp.reshape(b1, (hidden, 1)),                       # (hidden, 1)  f32
            jnp.transpose(w2).astype(jnp.bfloat16),             # (c_out, hidden)
            jnp.reshape(b2, (out_channels, 1)),                 # (c_out, 1)   f32
        )
        self.pe_consts = (
            jnp.asarray(_posenc_consts(co_pe_dim, co_pe_w_max)) if co_pe_dim is not None
            else jnp.zeros((2, 3), jnp.float32),
            jnp.asarray(_posenc_consts(ce_pe_dim, ce_pe_w_max)) if ce_pe_dim is not None
            else jnp.zeros((2, 3), jnp.float32),
        )

    def __call__(self, z_dec, coord, cell):
        return _liif_forward(z_dec, coord, cell, self.kparams, self.pe_consts,
                             self.co_pe_dim is not None, self.ce_pe_dim is not None)


# ----------------------------------------------------------------------------
# Example / smoke test
# ----------------------------------------------------------------------------

if __name__ == "__main__":
    key = jax.random.PRNGKey(0)
    k_model, k_feat = jax.random.split(key)

    B, C, Hf, Wf = 2, 32, 8, 8        # low-res decoder features (NCHW)
    h_out, w_out = 16, 16             # query resolution

    model = LIIF(k_model, z_dec_channels=C)
    z_dec = jax.random.normal(k_feat, (B, C, Hf, Wf), jnp.float32)

    # query coords: pixel centers of a (h_out, w_out) grid in [-1, 1], order (y, x)
    ys = _make_coord_1d(h_out)
    xs = _make_coord_1d(w_out)
    coord = jnp.stack(jnp.meshgrid(ys, xs, indexing="ij"), axis=-1)          # (h, w, 2)
    coord = jnp.broadcast_to(coord, (B, h_out, w_out, 2))
    cell = jnp.broadcast_to(
        jnp.array([2.0 / h_out, 2.0 / w_out], jnp.float32), (B, h_out, w_out, 2))

    out = jax.block_until_ready(model(z_dec, coord, cell))
    assert out.shape == (B, model.out_channels, h_out, w_out), out.shape

    # Plain-JAX f32 reference (posenc + concat + 3-layer MLP); loose tolerance since
    # the kernel runs the matmuls in bf16 with f32 accumulation.
    q_feat_t, rel_coord_t, rel_cell_t, _ = convert_liif_feat_coord_cell_t(z_dec, coord, cell)
    q_feat = jnp.transpose(q_feat_t, (0, 2, 1)).astype(jnp.float32)          # (B, Q, C)
    rel_coord = jnp.transpose(rel_coord_t, (0, 2, 1))                        # (B, Q, 2)
    rel_cell = jnp.transpose(rel_cell_t, (0, 2, 1))
    rc = convert_posenc(rel_coord, model.co_pe_dim, model.co_pe_w_max)
    ce = convert_posenc(rel_cell, model.ce_pe_dim, model.ce_pe_w_max)
    flat = jnp.concatenate([q_feat, rc, ce], axis=-1).reshape(-1, model.in_ch)
    w0, b0, w1, b1, w2, b2 = model.params
    hh = jnp.maximum(flat @ w0 + b0, 0.0)
    hh = jnp.maximum(hh @ w1 + b1, 0.0)
    ref = (hh @ w2 + b2).reshape(B, h_out, w_out, -1).transpose(0, 3, 1, 2)

    err = float(jnp.max(jnp.abs(out - ref)))
    assert err < 7e-2, f"max abs err {err}"
    print("KERNEL_OK")
</pallas_src>

<mosaic_0001>
module attributes {stable_mosaic.version = 11 : i64} {
  func.func @kernel(%arg0: i32, %arg1: i32, %arg2: memref<1x32x256xbf16, #tpu.memory_space<vmem>>, %arg3: memref<1x2x256xf32, #tpu.memory_space<vmem>>, %arg4: memref<1x2x256xf32, #tpu.memory_space<vmem>>, %arg5: memref<16x3xf32, #tpu.memory_space<vmem>>, %arg6: memref<16x3xf32, #tpu.memory_space<vmem>>, %arg7: memref<64x64xbf16, #tpu.memory_space<vmem>>, %arg8: memref<64x1xf32, #tpu.memory_space<vmem>>, %arg9: memref<64x64xbf16, #tpu.memory_space<vmem>>, %arg10: memref<64x1xf32, #tpu.memory_space<vmem>>, %arg11: memref<3x64xbf16, #tpu.memory_space<vmem>>, %arg12: memref<3x1xf32, #tpu.memory_space<vmem>>, %arg13: memref<1x3x256xf32, #tpu.memory_space<vmem>>, %arg14: memref<64x256xbf16, #tpu.memory_space<vmem>>) attributes {dimension_semantics = [#tpu.dimension_semantics<parallel>, #tpu.dimension_semantics<parallel>], iteration_bounds = array<i64: 2, 1>, scalar_prefetch = 0 : i64, scratch_operands = 1 : i64, tpu.core_type = #tpu.core_type<tc>, window_params = [{transform_indices = @transform_0, window_bounds = array<i64: 1, 32, 256>}, {transform_indices = @transform_1, window_bounds = array<i64: 1, 2, 256>}, {transform_indices = @transform_2, window_bounds = array<i64: 1, 2, 256>}, {pipeline_mode = #tpu.pipeline_mode<synchronous>, transform_indices = @transform_3, window_bounds = array<i64: 16, 3>}, {pipeline_mode = #tpu.pipeline_mode<synchronous>, transform_indices = @transform_4, window_bounds = array<i64: 16, 3>}, {pipeline_mode = #tpu.pipeline_mode<synchronous>, transform_indices = @transform_5, window_bounds = array<i64: 64, 64>}, {pipeline_mode = #tpu.pipeline_mode<synchronous>, transform_indices = @transform_6, window_bounds = array<i64: 64, 1>}, {pipeline_mode = #tpu.pipeline_mode<synchronous>, transform_indices = @transform_7, window_bounds = array<i64: 64, 64>}, {pipeline_mode = #tpu.pipeline_mode<synchronous>, transform_indices = @transform_8, window_bounds = array<i64: 64, 1>}, {pipeline_mode = #tpu.pipeline_mode<synchronous>, transform_indices = @transform_9, window_bounds = array<i64: 3, 64>}, {pipeline_mode = #tpu.pipeline_mode<synchronous>, transform_indices = @transform_10, window_bounds = array<i64: 3, 1>}, {transform_indices = @transform_11, window_bounds = array<i64: 1, 3, 256>}]} {
    %c0 = arith.constant 0 : index
    %c0_0 = arith.constant 0 : index
    %c0_1 = arith.constant 0 : index
    %0 = vector.load %arg2[%c0, %c0_0, %c0_1] : memref<1x32x256xbf16, #tpu.memory_space<vmem>>, vector<1x32x256xbf16>
    %1 = vector.shape_cast %0 : vector<1x32x256xbf16> to vector<32x256xbf16>
    %c0_2 = arith.constant 0 : index
    %c0_3 = arith.constant 0 : index
    %2 = vector.load %arg14[%c0_2, %c0_3] : memref<64x256xbf16, #tpu.memory_space<vmem>>, vector<32x256xbf16>
    tpu.vector_store %arg14[%c0_2, %c0_3], %1 {strides = array<i32>} : memref<64x256xbf16, #tpu.memory_space<vmem>>, vector<32x256xbf16>,
    %c0_4 = arith.constant 0 : index
    %c0_5 = arith.constant 0 : index
    %c0_6 = arith.constant 0 : index
    %3 = vector.load %arg3[%c0_4, %c0_5, %c0_6] : memref<1x2x256xf32, #tpu.memory_space<vmem>>, vector<1x2x256xf32>
    %4 = vector.shape_cast %3 : vector<1x2x256xf32> to vector<2x256xf32>
    %c0_7 = arith.constant 0 : index
    %c0_8 = arith.constant 0 : index
    %5 = vector.load %arg5[%c0_7, %c0_8] : memref<16x3xf32, #tpu.memory_space<vmem>>, vector<16x1xf32>
    %c0_9 = arith.constant 0 : index
    %c1 = arith.constant 1 : index
    %6 = vector.load %arg5[%c0_9, %c1] : memref<16x3xf32, #tpu.memory_space<vmem>>, vector<16x1xf32>
    %c0_10 = arith.constant 0 : index
    %c2 = arith.constant 2 : index
    %7 = vector.load %arg5[%c0_10, %c2] : memref<16x3xf32, #tpu.memory_space<vmem>>, vector<16x1xf32>
    %8 = vector.extract_strided_slice %4 {offsets = [0, 0], sizes = [1, 256], strides = [1, 1]} : vector<2x256xf32> to vector<1x256xf32>
    %9 = vector.broadcast %5 : vector<16x1xf32> to vector<16x256xf32>
    %10 = vector.broadcast %8 : vector<1x256xf32> to vector<16x256xf32>
    %11 = arith.mulf %9, %10 : vector<16x256xf32>
    %12 = vector.extract_strided_slice %4 {offsets = [1, 0], sizes = [1, 256], strides = [1, 1]} : vector<2x256xf32> to vector<1x256xf32>
    %13 = vector.broadcast %6 : vector<16x1xf32> to vector<16x256xf32>
    %14 = vector.broadcast %12 : vector<1x256xf32> to vector<16x256xf32>
    %15 = arith.mulf %13, %14 : vector<16x256xf32>
    %16 = arith.addf %11, %15 : vector<16x256xf32>
    %17 = vector.broadcast %7 : vector<16x1xf32> to vector<16x256xf32>
    %18 = arith.subf %16, %17 : vector<16x256xf32>
    %19 = math.cos %18 : vector<16x256xf32>
    %20 = arith.truncf %19 : vector<16x256xf32> to vector<16x256xbf16>
    %c32 = arith.constant 32 : index
    %c0_11 = arith.constant 0 : index
    %21 = vector.load %arg14[%c32, %c0_11] : memref<64x256xbf16, #tpu.memory_space<vmem>>, vector<16x256xbf16>
    tpu.vector_store %arg14[%c32, %c0_11], %20 {strides = array<i32>} : memref<64x256xbf16, #tpu.memory_space<vmem>>, vector<16x256xbf16>,
    %c0_12 = arith.constant 0 : index
    %c0_13 = arith.constant 0 : index
    %c0_14 = arith.constant 0 : index
    %22 = vector.load %arg4[%c0_12, %c0_13, %c0_14] : memref<1x2x256xf32, #tpu.memory_space<vmem>>, vector<1x2x256xf32>
    %23 = vector.shape_cast %22 : vector<1x2x256xf32> to vector<2x256xf32>
    %c0_15 = arith.constant 0 : index
    %c0_16 = arith.constant 0 : index
    %24 = vector.load %arg6[%c0_15, %c0_16] : memref<16x3xf32, #tpu.memory_space<vmem>>, vector<16x1xf32>
    %c0_17 = arith.constant 0 : index
    %c1_18 = arith.constant 1 : index
    %25 = vector.load %arg6[%c0_17, %c1_18] : memref<16x3xf32, #tpu.memory_space<vmem>>, vector<16x1xf32>
    %c0_19 = arith.constant 0 : index
    %c2_20 = arith.constant 2 : index
    %26 = vector.load %arg6[%c0_19, %c2_20] : memref<16x3xf32, #tpu.memory_space<vmem>>, vector<16x1xf32>
    %27 = vector.extract_strided_slice %23 {offsets = [0, 0], sizes = [1, 256], strides = [1, 1]} : vector<2x256xf32> to vector<1x256xf32>
    %28 = vector.broadcast %24 : vector<16x1xf32> to vector<16x256xf32>
    %29 = vector.broadcast %27 : vector<1x256xf32> to vector<16x256xf32>
    %30 = arith.mulf %28, %29 : vector<16x256xf32>
    %31 = vector.extract_strided_slice %23 {offsets = [1, 0], sizes = [1, 256], strides = [1, 1]} : vector<2x256xf32> to vector<1x256xf32>
    %32 = vector.broadcast %25 : vector<16x1xf32> to vector<16x256xf32>
    %33 = vector.broadcast %31 : vector<1x256xf32> to vector<16x256xf32>
    %34 = arith.mulf %32, %33 : vector<16x256xf32>
    %35 = arith.addf %30, %34 : vector<16x256xf32>
    %36 = vector.broadcast %26 : vector<16x1xf32> to vector<16x256xf32>
    %37 = arith.subf %35, %36 : vector<16x256xf32>
    %38 = math.cos %37 : vector<16x256xf32>
    %39 = arith.truncf %38 : vector<16x256xf32> to vector<16x256xbf16>
    %c48 = arith.constant 48 : index
    %c0_21 = arith.constant 0 : index
    %40 = vector.load %arg14[%c48, %c0_21] : memref<64x256xbf16, #tpu.memory_space<vmem>>, vector<16x256xbf16>
    tpu.vector_store %arg14[%c48, %c0_21], %39 {strides = array<i32>} : memref<64x256xbf16, #tpu.memory_space<vmem>>, vector<16x256xbf16>,
    %c0_22 = arith.constant 0 : index
    %c0_23 = arith.constant 0 : index
    %41 = vector.load %arg7[%c0_22, %c0_23] : memref<64x64xbf16, #tpu.memory_space<vmem>>, vector<64x64xbf16>
    %c0_24 = arith.constant 0 : index
    %c0_25 = arith.constant 0 : index
    %42 = vector.load %arg14[%c0_24, %c0_25] : memref<64x256xbf16, #tpu.memory_space<vmem>>, vector<64x256xbf16>
    %cst = arith.constant dense<0.000000e+00> : vector<64x256xf32>
    %43 = tpu.matmul %41, %42, %cst {dimension_numbers = #tpu.dot_dimension_numbers<[1], [0], [0], [1], [0, 0, 1, 1], [], []>} : vector<64x64xbf16>, vector<64x256xbf16>, vector<64x256xf32> -> vector<64x256xf32>
    %c0_26 = arith.constant 0 : index
    %c0_27 = arith.constant 0 : index
    %44 = vector.load %arg8[%c0_26, %c0_27] : memref<64x1xf32, #tpu.memory_space<vmem>>, vector<64x1xf32>
    %45 = vector.broadcast %44 : vector<64x1xf32> to vector<64x256xf32>
    %46 = arith.addf %43, %45 : vector<64x256xf32>
    %cst_28 = arith.constant 0.000000e+00 : f32
    %47 = vector.broadcast %cst_28 : f32 to vector<64x256xf32>
    %48 = arith.maximumf %46, %47 : vector<64x256xf32>
    %c0_29 = arith.constant 0 : index
    %c0_30 = arith.constant 0 : index
    %49 = vector.load %arg9[%c0_29, %c0_30] : memref<64x64xbf16, #tpu.memory_space<vmem>>, vector<64x64xbf16>
    %50 = arith.truncf %48 : vector<64x256xf32> to vector<64x256xbf16>
    %cst_31 = arith.constant dense<0.000000e+00> : vector<64x256xf32>
    %51 = tpu.matmul %49, %50, %cst_31 {dimension_numbers = #tpu.dot_dimension_numbers<[1], [0], [0], [1], [0, 0, 1, 1], [], []>} : vector<64x64xbf16>, vector<64x256xbf16>, vector<64x256xf32> -> vector<64x256xf32>
    %c0_32 = arith.constant 0 : index
    %c0_33 = arith.constant 0 : index
    %52 = vector.load %arg10[%c0_32, %c0_33] : memref<64x1xf32, #tpu.memory_space<vmem>>, vector<64x1xf32>
    %53 = vector.broadcast %52 : vector<64x1xf32> to vector<64x256xf32>
    %54 = arith.addf %51, %53 : vector<64x256xf32>
    %cst_34 = arith.constant 0.000000e+00 : f32
    %55 = vector.broadcast %cst_34 : f32 to vector<64x256xf32>
    %56 = arith.maximumf %54, %55 : vector<64x256xf32>
    %c0_35 = arith.constant 0 : index
    %c0_36 = arith.constant 0 : index
    %57 = vector.load %arg11[%c0_35, %c0_36] : memref<3x64xbf16, #tpu.memory_space<vmem>>, vector<3x64xbf16>
    %58 = arith.truncf %56 : vector<64x256xf32> to vector<64x256xbf16>
    %cst_37 = arith.constant dense<0.000000e+00> : vector<3x256xf32>
    %59 = tpu.matmul %57, %58, %cst_37 {dimension_numbers = #tpu.dot_dimension_numbers<[1], [0], [0], [1], [0, 0, 1, 1], [], []>} : vector<3x64xbf16>, vector<64x256xbf16>, vector<3x256xf32> -> vector<3x256xf32>
    %c0_38 = arith.constant 0 : index
    %c0_39 = arith.constant 0 : index
    %60 = vector.load %arg12[%c0_38, %c0_39] : memref<3x1xf32, #tpu.memory_space<vmem>>, vector<3x1xf32>
    %61 = vector.broadcast %60 : vector<3x1xf32> to vector<3x256xf32>
    %62 = arith.addf %59, %61 : vector<3x256xf32>
    %c0_40 = arith.constant 0 : index
    %c0_41 = arith.constant 0 : index
    %c0_42 = arith.constant 0 : index
    %63 = vector.load %arg13[%c0_40, %c0_41, %c0_42] : memref<1x3x256xf32, #tpu.memory_space<vmem>>, vector<1x3x256xf32>
    %64 = vector.shape_cast %63 : vector<1x3x256xf32> to vector<3x256xf32>
    %65 = vector.shape_cast %62 : vector<3x256xf32> to vector<1x3x256xf32>
    tpu.vector_store %arg13[%c0_40, %c0_41, %c0_42], %65 {strides = array<i32>} : memref<1x3x256xf32, #tpu.memory_space<vmem>>, vector<1x3x256xf32>,
    return
  }
  func.func @transform_0(%arg0: i32, %arg1: i32) -> (i32, i32, i32) {
    %c0_i32 = arith.constant 0 : i32
    %c0_i32_0 = arith.constant 0 : i32
    return %arg0, %c0_i32, %arg1 : i32, i32, i32
  }
  func.func @transform_1(%arg0: i32, %arg1: i32) -> (i32, i32, i32) {
    %c0_i32 = arith.constant 0 : i32
    %c0_i32_0 = arith.constant 0 : i32
    return %arg0, %c0_i32, %arg1 : i32, i32, i32
  }
  func.func @transform_2(%arg0: i32, %arg1: i32) -> (i32, i32, i32) {
    %c0_i32 = arith.constant 0 : i32
    %c0_i32_0 = arith.constant 0 : i32
    return %arg0, %c0_i32, %arg1 : i32, i32, i32
  }
  func.func @transform_3(%arg0: i32, %arg1: i32) -> (i32, i32) {
    %c0_i32 = arith.constant 0 : i32
    %c0_i32_0 = arith.constant 0 : i32
    %c0_i32_1 = arith.constant 0 : i32
    return %c0_i32, %c0_i32_0 : i32, i32
  }
  func.func @transform_4(%arg0: i32, %arg1: i32) -> (i32, i32) {
    %c0_i32 = arith.constant 0 : i32
    %c0_i32_0 = arith.constant 0 : i32
    %c0_i32_1 = arith.constant 0 : i32
    return %c0_i32, %c0_i32_0 : i32, i32
  }
  func.func @transform_5(%arg0: i32, %arg1: i32) -> (i32, i32) {
    %c0_i32 = arith.constant 0 : i32
    %c0_i32_0 = arith.constant 0 : i32
    %c0_i32_1 = arith.constant 0 : i32
    return %c0_i32, %c0_i32_0 : i32, i32
  }
  func.func @transform_6(%arg0: i32, %arg1: i32) -> (i32, i32) {
    %c0_i32 = arith.constant 0 : i32
    %c0_i32_0 = arith.constant 0 : i32
    %c0_i32_1 = arith.constant 0 : i32
    return %c0_i32, %c0_i32_0 : i32, i32
  }
  func.func @transform_7(%arg0: i32, %arg1: i32) -> (i32, i32) {
    %c0_i32 = arith.constant 0 : i32
    %c0_i32_0 = arith.constant 0 : i32
    %c0_i32_1 = arith.constant 0 : i32
    return %c0_i32, %c0_i32_0 : i32, i32
  }
  func.func @transform_8(%arg0: i32, %arg1: i32) -> (i32, i32) {
    %c0_i32 = arith.constant 0 : i32
    %c0_i32_0 = arith.constant 0 : i32
    %c0_i32_1 = arith.constant 0 : i32
    return %c0_i32, %c0_i32_0 : i32, i32
  }
  func.func @transform_9(%arg0: i32, %arg1: i32) -> (i32, i32) {
    %c0_i32 = arith.constant 0 : i32
    %c0_i32_0 = arith.constant 0 : i32
    %c0_i32_1 = arith.constant 0 : i32
    return %c0_i32, %c0_i32_0 : i32, i32
  }
  func.func @transform_10(%arg0: i32, %arg1: i32) -> (i32, i32) {
    %c0_i32 = arith.constant 0 : i32
    %c0_i32_0 = arith.constant 0 : i32
    %c0_i32_1 = arith.constant 0 : i32
    return %c0_i32, %c0_i32_0 : i32, i32
  }
  func.func @transform_11(%arg0: i32, %arg1: i32) -> (i32, i32, i32) {
    %c0_i32 = arith.constant 0 : i32
    %c0_i32_0 = arith.constant 0 : i32
    return %arg0, %c0_i32, %arg1 : i32, i32, i32
  }
}

</mosaic_0001>

<llo_original>
// kernel: _liif_forward.1
$region0: #{_liif_forward.1}
  #allocation0 [shape = 'u32[]', space=smem, size = 0x4, offset = 0x4, fixed_abs, tag = 'smem constant byte address 0x4 - core index']
  #allocation1 [shape = 'u32[72,128]{1,0:T(1,128)}', space=vmem, size = 0x9000, scoped, tag = 'internal scratch']
  #allocation2 [shape = 'bf16[64,256]{1,0:T(8,128)(2,1)}', space=vmem, size = 0x8000, scoped, tag = 'scratch operand']
  %s0 = inlined_call_operand.vmem [shape: bf16[2,32,256], index: 0, kind: input, shape index: {}]
  %s1 = inlined_call_operand.vmem [shape: f32[2,2,256], index: 1, kind: input, shape index: {}]
  %s2 = inlined_call_operand.vmem [shape: f32[2,2,256], index: 2, kind: input, shape index: {}]
  %s3 = inlined_call_operand.vmem [shape: f32[16,3], index: 3, kind: input, shape index: {}]
  %s4 = inlined_call_operand.vmem [shape: f32[16,3], index: 4, kind: input, shape index: {}]
  %s5 = inlined_call_operand.vmem [shape: bf16[64,64], index: 5, kind: input, shape index: {}]
  %s6 = inlined_call_operand.vmem [shape: f32[64,1], index: 6, kind: input, shape index: {}]
  %s7 = inlined_call_operand.vmem [shape: bf16[64,64], index: 7, kind: input, shape index: {}]
  %s8 = inlined_call_operand.vmem [shape: f32[64,1], index: 8, kind: input, shape index: {}]
  %s9 = inlined_call_operand.vmem [shape: bf16[3,64], index: 9, kind: input, shape index: {}]
  %s10 = inlined_call_operand.vmem [shape: f32[3,1], index: 10, kind: input, shape index: {}]
  %s11 = inlined_call_operand.vmem [shape: f32[2,3,256], index: 11, kind: output, shape index: {}]
  %s12 = sld [smem:[#allocation0]]
  $region77: #{_liif_forward.1} parent=0
    _
  %s14 = ssub.s32 1, %s12
  %s15 = scalar_select 0, %s14, %s12
  loop: start=0, step=1, limit=4
  $region2: #{_liif_forward.1} parent=0 // loop_pre_header
    _
  $region3: #{_liif_forward.1} parent=0 // loop_header
    %s17 = sphi 0, %s21
    %p18 = scmp.ge.s32.totalorder %s17, 4
    %s24 = sphi 0, %s36
    %s25 = sphi 0, %s32
    %s26 = sphi 0, %s24
    %s27 = sphi 0, %s25
    %s28 = sphi 0, %s26
    %s29 = sphi 0, %s27
    %s41 = sphi 0, %s43
    %s44 = sphi 0, %s41
    %s45 = sphi 0, %s44
    %s61 = sphi 0, %s45
    %s69 = sphi 0, %s71
    %s72 = sphi 0, %s69
    %s73 = sphi 0, %s72
    %s89 = sphi 0, %s73
    %s97 = sphi 0, %s99
    %s100 = sphi 0, %s97
    %s101 = sphi 0, %s100
    %s117 = sphi 0, %s101
    %s121 = sphi 0, %s121
    %s123 = sphi 0, %s121
    %s124 = sphi 0, %s123
    %s138 = sphi 0, %s124
    %s142 = sphi 0, %s142
    %s144 = sphi 0, %s142
    %s145 = sphi 0, %s144
    %s159 = sphi 0, %s145
    %s163 = sphi 0, %s163
    %s165 = sphi 0, %s163
    %s166 = sphi 0, %s165
    %s180 = sphi 0, %s166
    %s184 = sphi 0, %s184
    %s186 = sphi 0, %s184
    %s187 = sphi 0, %s186
    %s201 = sphi 0, %s187
    %s205 = sphi 0, %s205
    %s207 = sphi 0, %s205
    %s208 = sphi 0, %s207
    %s222 = sphi 0, %s208
    %s226 = sphi 0, %s226
    %s228 = sphi 0, %s226
    %s229 = sphi 0, %s228
    %s243 = sphi 0, %s229
    %s247 = sphi 0, %s247
    %s249 = sphi 0, %s247
    %s250 = sphi 0, %s249
    %s264 = sphi 0, %s250
    %s268 = sphi 0, %s268
    %s270 = sphi 0, %s268
    %s271 = sphi 0, %s270
    %s285 = sphi 0, %s271
    %s293 = sphi 0, %s295
    %s296 = sphi 0, %s293
    %s297 = sphi 0, %s296
    %s313 = sphi 0, %s297
  $region4: #{_liif_forward.1} parent=0 // loop_header_branch
    %20 = sbr.rel (%p18) target = $region8
  $region5: #{_liif_forward.1} parent=0 // loop_body
    %s22 = ssub.s32 %s17, 1
    %s23 = ssub.s32 %s17, 2
    %s30 = sadd.s32 1, %s25
    %p31 = scmp.ge.s32.totalorder %s30, 1
    %s32 = scalar_select %p31, 0, %s30
    %s33 = sadd.s32 1, %s24
    %s34 = scalar_select %p31, %s33, %s24
    %p35 = scmp.ge.s32.totalorder %s34, 2
    %s36 = scalar_select %p35, 0, %s34
    %s37 = ssub.s32 %s24, %s36
    %s38 = ssub.s32 %s25, %s32
    %s39 = sor.u32 %s37, %s38
    %p40 = scmp.eq.s32.totalorder %s39, 0
    %s42 = sadd.s32 %s41, 1
    %s43 = scalar_select %p40, %s41, %s42
    %p46 = pneg %p40
    %p47 = scmp.eq.s32.totalorder %s17, 1
    %p48 = por %p46, %p47
    %p49 = scmp.ne.s32.totalorder %s41, %s44
    %p50 = scmp.eq.s32.totalorder %s17, 0
    %p51 = por %p49, %p50
    %p52 = scmp.ne.s32.totalorder %s41, %s44
    %p53 = scmp.eq.s32.totalorder %s22, 1
    %p54 = por %p52, %p53
    %p55 = scmp.ne.s32.totalorder %s44, %s45
    %p56 = scmp.eq.s32.totalorder %s22, 0
    %p57 = por %p55, %p56
    %p58 = scmp.ne.s32.totalorder %s44, %s45
    %p59 = scmp.eq.s32.totalorder %s23, 1
    %p60 = por %p58, %p59
    %p62 = scmp.ne.s32.totalorder %s45, %s61
    %p63 = scmp.eq.s32.totalorder %s23, 0
    %p64 = por %p62, %p63
    %s65 = ssub.s32 %s24, %s36
    %s66 = ssub.s32 %s25, %s32
    %s67 = sor.u32 %s65, %s66
    %p68 = scmp.eq.s32.totalorder %s67, 0
    %s70 = sadd.s32 %s69, 1
    %s71 = scalar_select %p68, %s69, %s70
    %p74 = pneg %p68
    %p75 = scmp.eq.s32.totalorder %s17, 1
    %p76 = por %p74, %p75
    %p77 = scmp.ne.s32.totalorder %s69, %s72
    %p78 = scmp.eq.s32.totalorder %s17, 0
    %p79 = por %p77, %p78
    %p80 = scmp.ne.s32.totalorder %s69, %s72
    %p81 = scmp.eq.s32.totalorder %s22, 1
    %p82 = por %p80, %p81
    %p83 = scmp.ne.s32.totalorder %s72, %s73
    %p84 = scmp.eq.s32.totalorder %s22, 0
    %p85 = por %p83, %p84
    %p86 = scmp.ne.s32.totalorder %s72, %s73
    %p87 = scmp.eq.s32.totalorder %s23, 1
    %p88 = por %p86, %p87
    %p90 = scmp.ne.s32.totalorder %s73, %s89
    %p91 = scmp.eq.s32.totalorder %s23, 0
    %p92 = por %p90, %p91
    %s93 = ssub.s32 %s24, %s36
    %s94 = ssub.s32 %s25, %s32
    %s95 = sor.u32 %s93, %s94
    %p96 = scmp.eq.s32.totalorder %s95, 0
    %s98 = sadd.s32 %s97, 1
    %s99 = scalar_select %p96, %s97, %s98
    %p102 = pneg %p96
    %p103 = scmp.eq.s32.totalorder %s17, 1
    %p104 = por %p102, %p103
    %p105 = scmp.ne.s32.totalorder %s97, %s100
    %p106 = scmp.eq.s32.totalorder %s17, 0
    %p107 = por %p105, %p106
    %p108 = scmp.ne.s32.totalorder %s97, %s100
    %p109 = scmp.eq.s32.totalorder %s22, 1
    %p110 = por %p108, %p109
    %p111 = scmp.ne.s32.totalorder %s100, %s101
    %p112 = scmp.eq.s32.totalorder %s22, 0
    %p113 = por %p111, %p112
    %p114 = scmp.ne.s32.totalorder %s100, %s101
    %p115 = scmp.eq.s32.totalorder %s23, 1
    %p116 = por %p114, %p115
    %p118 = scmp.ne.s32.totalorder %s101, %s117
    %p119 = scmp.eq.s32.totalorder %s23, 0
    %p120 = por %p118, %p119
    %s122 = sadd.s32 %s121, 1
    %p125 = scmp.eq.s32.totalorder %s17, 1
    %p126 = scmp.ne.s32.totalorder %s121, %s123
    %p127 = scmp.eq.s32.totalorder %s17, 0
    %p128 = por %p126, %p127
    %p129 = scmp.ne.s32.totalorder %s121, %s123
    %p130 = scmp.eq.s32.totalorder %s22, 1
    %p131 = por %p129, %p130
    %p132 = scmp.ne.s32.totalorder %s123, %s124
    %p133 = scmp.eq.s32.totalorder %s22, 0
    %p134 = por %p132, %p133
    %p135 = scmp.ne.s32.totalorder %s123, %s124
    %p136 = scmp.eq.s32.totalorder %s23, 1
    %p137 = por %p135, %p136
    %p139 = scmp.ne.s32.totalorder %s124, %s138
    %p140 = scmp.eq.s32.totalorder %s23, 0
    %p141 = por %p139, %p140
    %s143 = sadd.s32 %s142, 1
    %p146 = scmp.eq.s32.totalorder %s17, 1
    %p147 = scmp.ne.s32.totalorder %s142, %s144
    %p148 = scmp.eq.s32.totalorder %s17, 0
    %p149 = por %p147, %p148
    %p150 = scmp.ne.s32.totalorder %s142, %s144
    %p151 = scmp.eq.s32.totalorder %s22, 1
    %p152 = por %p150, %p151
    %p153 = scmp.ne.s32.totalorder %s144, %s145
    %p154 = scmp.eq.s32.totalorder %s22, 0
    %p155 = por %p153, %p154
    %p156 = scmp.ne.s32.totalorder %s144, %s145
    %p157 = scmp.eq.s32.totalorder %s23, 1
    %p158 = por %p156, %p157
    %p160 = scmp.ne.s32.totalorder %s145, %s159
    %p161 = scmp.eq.s32.totalorder %s23, 0
    %p162 = por %p160, %p161
    %s164 = sadd.s32 %s163, 1
    %p167 = scmp.eq.s32.totalorder %s17, 1
    %p168 = scmp.ne.s32.totalorder %s163, %s165
    %p169 = scmp.eq.s32.totalorder %s17, 0
    %p170 = por %p168, %p169
    %p171 = scmp.ne.s32.totalorder %s163, %s165
    %p172 = scmp.eq.s32.totalorder %s22, 1
    %p173 = por %p171, %p172
    %p174 = scmp.ne.s32.totalorder %s165, %s166
    %p175 = scmp.eq.s32.totalorder %s22, 0
    %p176 = por %p174, %p175
    %p177 = scmp.ne.s32.totalorder %s165, %s166
    %p178 = scmp.eq.s32.totalorder %s23, 1
    %p179 = por %p177, %p178
    %p181 = scmp.ne.s32.totalorder %s166, %s180
    %p182 = scmp.eq.s32.totalorder %s23, 0
    %p183 = por %p181, %p182
    %s185 = sadd.s32 %s184, 1
    %p188 = scmp.eq.s32.totalorder %s17, 1
    %p189 = scmp.ne.s32.totalorder %s184, %s186
    %p190 = scmp.eq.s32.totalorder %s17, 0
    %p191 = por %p189, %p190
    %p192 = scmp.ne.s32.totalorder %s184, %s186
    %p193 = scmp.eq.s32.totalorder %s22, 1
    %p194 = por %p192, %p193
    %p195 = scmp.ne.s32.totalorder %s186, %s187
    %p196 = scmp.eq.s32.totalorder %s22, 0
    %p197 = por %p195, %p196
    %p198 = scmp.ne.s32.totalorder %s186, %s187
    %p199 = scmp.eq.s32.totalorder %s23, 1
    %p200 = por %p198, %p199
    %p202 = scmp.ne.s32.totalorder %s187, %s201
    %p203 = scmp.eq.s32.totalorder %s23, 0
    %p204 = por %p202, %p203
    %s206 = sadd.s32 %s205, 1
    %p209 = scmp.eq.s32.totalorder %s17, 1
    %p210 = scmp.ne.s32.totalorder %s205, %s207
    %p211 = scmp.eq.s32.totalorder %s17, 0
    %p212 = por %p210, %p211
    %p213 = scmp.ne.s32.totalorder %s205, %s207
    %p214 = scmp.eq.s32.totalorder %s22, 1
    %p215 = por %p213, %p214
    %p216 = scmp.ne.s32.totalorder %s207, %s208
    %p217 = scmp.eq.s32.totalorder %s22, 0
    %p218 = por %p216, %p217
    %p219 = scmp.ne.s32.totalorder %s207, %s208
    %p220 = scmp.eq.s32.totalorder %s23, 1
    %p221 = por %p219, %p220
    %p223 = scmp.ne.s32.totalorder %s208, %s222
    %p224 = scmp.eq.s32.totalorder %s23, 0
    %p225 = por %p223, %p224
    %s227 = sadd.s32 %s226, 1
    %p230 = scmp.eq.s32.totalorder %s17, 1
    %p231 = scmp.ne.s32.totalorder %s226, %s228
    %p232 = scmp.eq.s32.totalorder %s17, 0
    %p233 = por %p231, %p232
    %p234 = scmp.ne.s32.totalorder %s226, %s228
    %p235 = scmp.eq.s32.totalorder %s22, 1
    %p236 = por %p234, %p235
    %p237 = scmp.ne.s32.totalorder %s228, %s229
    %p238 = scmp.eq.s32.totalorder %s22, 0
    %p239 = por %p237, %p238
    %p240 = scmp.ne.s32.totalorder %s228, %s229
    %p241 = scmp.eq.s32.totalorder %s23, 1
    %p242 = por %p240, %p241
    %p244 = scmp.ne.s32.totalorder %s229, %s243
    %p245 = scmp.eq.s32.totalorder %s23, 0
    %p246 = por %p244, %p245
    %s248 = sadd.s32 %s247, 1
    %p251 = scmp.eq.s32.totalorder %s17, 1
    %p252 = scmp.ne.s32.totalorder %s247, %s249
    %p253 = scmp.eq.s32.totalorder %s17, 0
    %p254 = por %p252, %p253
    %p255 = scmp.ne.s32.totalorder %s247, %s249
    %p256 = scmp.eq.s32.totalorder %s22, 1
    %p257 = por %p255, %p256
    %p258 = scmp.ne.s32.totalorder %s249, %s250
    %p259 = scmp.eq.s32.totalorder %s22, 0
    %p260 = por %p258, %p259
    %p261 = scmp.ne.s32.totalorder %s249, %s250
    %p262 = scmp.eq.s32.totalorder %s23, 1
    %p263 = por %p261, %p262
    %p265 = scmp.ne.s32.totalorder %s250, %s264
    %p266 = scmp.eq.s32.totalorder %s23, 0
    %p267 = por %p265, %p266
    %s269 = sadd.s32 %s268, 1
    %p272 = scmp.eq.s32.totalorder %s17, 1
    %p273 = scmp.ne.s32.totalorder %s268, %s270
    %p274 = scmp.eq.s32.totalorder %s17, 0
    %p275 = por %p273, %p274
    %p276 = scmp.ne.s32.totalorder %s268, %s270
    %p277 = scmp.eq.s32.totalorder %s22, 1
    %p278 = por %p276, %p277
    %p279 = scmp.ne.s32.totalorder %s270, %s271
    %p280 = scmp.eq.s32.totalorder %s22, 0
    %p281 = por %p279, %p280
    %p282 = scmp.ne.s32.totalorder %s270, %s271
    %p283 = scmp.eq.s32.totalorder %s23, 1
    %p284 = por %p282, %p283
    %p286 = scmp.ne.s32.totalorder %s271, %s285
    %p287 = scmp.eq.s32.totalorder %s23, 0
    %p288 = por %p286, %p287
    %s289 = ssub.s32 %s24, %s36
    %s290 = ssub.s32 %s25, %s32
    %s291 = sor.u32 %s289, %s290
    %p292 = scmp.eq.s32.totalorder %s291, 0
    %s294 = sadd.s32 %s293, 1
    %s295 = scalar_select %p292, %s293, %s294
    %p298 = pneg %p292
    %p299 = scmp.eq.s32.totalorder %s17, 1
    %p300 = por %p298, %p299
    %p301 = scmp.ne.s32.totalorder %s293, %s296
    %p302 = scmp.eq.s32.totalorder %s17, 0
    %p303 = por %p301, %p302
    %p304 = scmp.ne.s32.totalorder %s293, %s296
    %p305 = scmp.eq.s32.totalorder %s22, 1
    %p306 = por %p304, %p305
    %p307 = scmp.ne.s32.totalorder %s296, %s297
    %p308 = scmp.eq.s32.totalorder %s22, 0
    %p309 = por %p307, %p308
    %p310 = scmp.ne.s32.totalorder %s296, %s297
    %p311 = scmp.eq.s32.totalorder %s23, 1
    %p312 = por %p310, %p311
    %p314 = scmp.ne.s32.totalorder %s297, %s313
    %p315 = scmp.eq.s32.totalorder %s23, 0
    %p316 = por %p314, %p315
    %p317 = scmp.le.s32.totalorder 1, %s17
    %p318 = scmp.lt.s32.totalorder %s17, 3
    %p319 = pnand %p317, %p318
    %p320 = pneg %p319
    // Predicated region
    $region9: #{_liif_forward.1} parent=5 // pred_check
      _
    $region10: #{_liif_forward.1} parent=5 // pred_check_branch
      %322 = sbr.rel (%p319) target = $region12
    $region11: #{_liif_forward.1} parent=5 // pred_region
      %s323 = ssub.s32 %s17, 1
      // Predicated region
      $region13: #{_liif_forward.1} parent=11 // pred_check
        %p324 = pneg %p134
      $region14: #{_liif_forward.1} parent=11 // pred_check_branch
        %326 = sbr.rel (%p324) target = $region16
      $region15: #{_liif_forward.1} parent=11 // pred_region
        _
      $region16: #{_liif_forward.1} parent=11 // pred_fallthru
        _
      // Predicated region
      $region17: #{_liif_forward.1} parent=11 // pred_check
        %p327 = pneg %p155
      $region18: #{_liif_forward.1} parent=11 // pred_check_branch
        %329 = sbr.rel (%p327) target = $region20
      $region19: #{_liif_forward.1} parent=11 // pred_region
        _
      $region20: #{_liif_forward.1} parent=11 // pred_fallthru
        _
      // Predicated region
      $region21: #{_liif_forward.1} parent=11 // pred_check
        %p330 = pneg %p176
      $region22: #{_liif_forward.1} parent=11 // pred_check_branch
        %332 = sbr.rel (%p330) target = $region24
      $region23: #{_liif_forward.1} parent=11 // pred_region
        _
      $region24: #{_liif_forward.1} parent=11 // pred_fallthru
        _
      // Predicated region
      $region25: #{_liif_forward.1} parent=11 // pred_check
        %p333 = pneg %p197
      $region26: #{_liif_forward.1} parent=11 // pred_check_branch
        %335 = sbr.rel (%p333) target = $region28
      $region27: #{_liif_forward.1} parent=11 // pred_region
        _
      $region28: #{_liif_forward.1} parent=11 // pred_fallthru
        _
      // Predicated region
      $region29: #{_liif_forward.1} parent=11 // pred_check
        %p336 = pneg %p218
      $region30: #{_liif_forward.1} parent=11 // pred_check_branch
        %338 = sbr.rel (%p336) target = $region32
      $region31: #{_liif_forward.1} parent=11 // pred_region
        _
      $region32: #{_liif_forward.1} parent=11 // pred_fallthru
        _
      // Predicated region
      $region33: #{_liif_forward.1} parent=11 // pred_check
        %p339 = pneg %p239
      $region34: #{_liif_forward.1} parent=11 // pred_check_branch
        %341 = sbr.rel (%p339) target = $region36
      $region35: #{_liif_forward.1} parent=11 // pred_region
        _
      $region36: #{_liif_forward.1} parent=11 // pred_fallthru
        _
      // Predicated region
      $region37: #{_liif_forward.1} parent=11 // pred_check
        %p342 = pneg %p260
      $region38: #{_liif_forward.1} parent=11 // pred_check_branch
        %344 = sbr.rel (%p342) target = $region40
      $region39: #{_liif_forward.1} parent=11 // pred_region
        _
      $region40: #{_liif_forward.1} parent=11 // pred_fallthru
        _
      // Predicated region
      $region41: #{_liif_forward.1} parent=11 // pred_check
        %p345 = pneg %p281
      $region42: #{_liif_forward.1} parent=11 // pred_check_branch
        %347 = sbr.rel (%p345) target = $region44
      $region43: #{_liif_forward.1} parent=11 // pred_region
        _
      $region44: #{_liif_forward.1} parent=11 // pred_fallthru
        _
    $region12: #{_liif_forward.1} parent=5 // pred_fallthru
      _
    %p348 = scmp.lt.s32.totalorder %s17, 2
    // Predicated region
    $region45: #{_liif_forward.1} parent=5 // pred_check
      %p349 = pneg %p348
    $region46: #{_liif_forward.1} parent=5 // pred_check_branch
      %351 = sbr.rel (%p349) target = $region48
    $region47: #{_liif_forward.1} parent=5 // pred_region
      // Predicated region
      $region49: #{_liif_forward.1} parent=47 // pred_check
        %p352 = pneg %p51
      $region50: #{_liif_forward.1} parent=47 // pred_check_branch
        %354 = sbr.rel (%p352) target = $region52
      $region51: #{_liif_forward.1} parent=47 // pred_region
        %s355 = smul.u32 2, %s25
        %p356 = scmp.lt.s32.totalorder %s24, 1
        %s357 = scalar_select %p356, %s24, 1
        %p358 = scmp.lt.s32.totalorder %s355, 1
        %s359 = scalar_select %p358, %s355, 1
        %s360 = smul.addr %s357, 8
        %s361 = sadd.s32 %s359, %s360
        %s362 = smul.addr %s361, 4
        %s363 = scalar_lea.vmem %s0, %s362
        %s364 = smul.u32 2, %s25
      $region52: #{_liif_forward.1} parent=47 // pred_fallthru
        _
      // Predicated region
      $region53: #{_liif_forward.1} parent=47 // pred_check
        %p365 = pneg %p79
      $region54: #{_liif_forward.1} parent=47 // pred_check_branch
        %367 = sbr.rel (%p365) target = $region56
      $region55: #{_liif_forward.1} parent=47 // pred_region
        %s368 = smul.u32 2, %s25
        %p369 = scmp.lt.s32.totalorder %s24, 1
        %s370 = scalar_select %p369, %s24, 1
        %p371 = scmp.lt.s32.totalorder %s368, 1
        %s372 = scalar_select %p371, %s368, 1
        %s373 = smul.addr %s370, 2
        %s374 = sadd.s32 %s372, %s373
        %s375 = smul.addr %s374, 2
        %s376 = scalar_lea.vmem %s1, %s375
        %s377 = smul.u32 2, %s25
      $region56: #{_liif_forward.1} parent=47 // pred_fallthru
        _
      // Predicated region
      $region57: #{_liif_forward.1} parent=47 // pred_check
        %p378 = pneg %p107
      $region58: #{_liif_forward.1} parent=47 // pred_check_branch
        %380 = sbr.rel (%p378) target = $region60
      $region59: #{_liif_forward.1} parent=47 // pred_region
        %s381 = smul.u32 2, %s25
        %p382 = scmp.lt.s32.totalorder %s24, 1
        %s383 = scalar_select %p382, %s24, 1
        %p384 = scmp.lt.s32.totalorder %s381, 1
        %s385 = scalar_select %p384, %s381, 1
        %s386 = smul.addr %s383, 2
        %s387 = sadd.s32 %s385, %s386
        %s388 = smul.addr %s387, 2
        %s389 = scalar_lea.vmem %s2, %s388
        %s390 = smul.u32 2, %s25
      $region60: #{_liif_forward.1} parent=47 // pred_fallthru
        _
    $region48: #{_liif_forward.1} parent=5 // pred_fallthru
      _
    %p391 = scmp.le.s32.totalorder 1, %s17
    %p392 = scmp.lt.s32.totalorder %s17, 3
    %p393 = pnand %p391, %p392
    %p394 = pneg %p393
    // Predicated region
    $region61: #{_liif_forward.1} parent=5 // pred_check
      _
    $region62: #{_liif_forward.1} parent=5 // pred_check_branch
      %396 = sbr.rel (%p393) target = $region64
    $region63: #{_liif_forward.1} parent=5 // pred_region
      %s397 = ssub.s32 %s17, 1
      %s398 = smul.u32 2, %s27
      %p399 = scmp.lt.s32.totalorder %s26, 1
      %s400 = scalar_select %p399, %s26, 1
      %p401 = scmp.lt.s32.totalorder %s398, 1
      %s402 = scalar_select %p401, %s398, 1
      %s403 = smul.addr %s400, 8
      %s404 = sadd.s32 %s402, %s403
      %s405 = smul.addr %s404, 4
      %s406 = scalar_lea.vmem %s0, %s405
      %p407 = pneg %p57
      %p408 = pneg %p54
      %s409 = smul.u32 2, %s27
      %p410 = scmp.lt.s32.totalorder %s26, 1
      %s411 = scalar_select %p410, %s26, 1
      %p412 = scmp.lt.s32.totalorder %s409, 1
      %s413 = scalar_select %p412, %s409, 1
      %s414 = smul.addr %s411, 2
      %s415 = sadd.s32 %s413, %s414
      %s416 = smul.addr %s415, 2
      %s417 = scalar_lea.vmem %s1, %s416
      %p418 = pneg %p85
      %p419 = pneg %p82
      %s420 = smul.u32 2, %s27
      %p421 = scmp.lt.s32.totalorder %s26, 1
      %s422 = scalar_select %p421, %s26, 1
      %p423 = scmp.lt.s32.totalorder %s420, 1
      %s424 = scalar_select %p423, %s420, 1
      %s425 = smul.addr %s422, 2
      %s426 = sadd.s32 %s424, %s425
      %s427 = smul.addr %s426, 2
      %s428 = scalar_lea.vmem %s2, %s427
      %p429 = pneg %p113
      %p430 = pneg %p110
      %p431 = pneg %p134
      %p432 = pneg %p131
      %p433 = pneg %p155
      %p434 = pneg %p152
      %p435 = pneg %p176
      %p436 = pneg %p173
      %p437 = pneg %p197
      %p438 = pneg %p194
      %p439 = pneg %p218
      %p440 = pneg %p215
      %p441 = pneg %p239
      %p442 = pneg %p236
      %p443 = pneg %p260
      %p444 = pneg %p257
      %p445 = pneg %p281
      %p446 = pneg %p278
      %p447 = pneg %p309
      %p448 = pneg %p306
      %s449 = smul.u32 2, %s27
      %p450 = scmp.lt.s32.totalorder %s26, 1
      %s451 = scalar_select %p450, %s26, 1
      %p452 = scmp.lt.s32.totalorder %s449, 1
      %s453 = scalar_select %p452, %s449, 1
      %s454 = smul.addr %s451, 2
      %s455 = sadd.s32 %s453, %s454
      %s456 = smul.addr %s455, 4
      %s457 = scalar_lea.vmem %s11, %s456
      %s458 = smul.u32 2, %s27
      %p459 = scmp.lt.s32.totalorder %s26, 1
      %s460 = scalar_select %p459, %s26, 1
      %p461 = scmp.lt.s32.totalorder %s458, 1
      %s462 = scalar_select %p461, %s458, 1
      %s463 = smul.addr %s460, 8
      %s464 = sadd.s32 %s462, %s463
      %s465 = smul.addr %s464, 4
      %s466 = scalar_lea.vmem %s0, %s465
      %s467 = smul.u32 2, %s27
      %s468 = smul.u32 2, %s27
      %p469 = scmp.lt.s32.totalorder %s26, 1
      %s470 = scalar_select %p469, %s26, 1
      %p471 = scmp.lt.s32.totalorder %s468, 1
      %s472 = scalar_select %p471, %s468, 1
      %s473 = smul.addr %s470, 2
      %s474 = sadd.s32 %s472, %s473
      %s475 = smul.addr %s474, 2
      %s476 = scalar_lea.vmem %s1, %s475
      %s477 = smul.u32 2, %s27
      %s478 = smul.u32 2, %s27
      %p479 = scmp.lt.s32.totalorder %s26, 1
      %s480 = scalar_select %p479, %s26, 1
      %p481 = scmp.lt.s32.totalorder %s478, 1
      %s482 = scalar_select %p481, %s478, 1
      %s483 = smul.addr %s480, 2
      %s484 = sadd.s32 %s482, %s483
      %s485 = smul.addr %s484, 2
      %s486 = scalar_lea.vmem %s2, %s485
      %s487 = smul.u32 2, %s27
      %s488 = smul.u32 2, %s27
      %p489 = scmp.lt.s32.totalorder %s26, 1
      %s490 = scalar_select %p489, %s26, 1
      %p491 = scmp.lt.s32.totalorder %s488, 1
      %s492 = scalar_select %p491, %s488, 1
      %s493 = smul.addr %s490, 2
      %s494 = sadd.s32 %s492, %s493
      %s495 = smul.addr %s494, 4
      %s496 = scalar_lea.vmem %s11, %s495
      %s497 = smul.u32 2, %s27
      %v499 = vld [vmem:[%s466] sm:$0xff]
      %v500 = vld [vmem:[%s466 + $0x8] sm:$0xff]
      %v501 = vld [vmem:[%s466 + $0x10] sm:$0xff]
      %v502 = vld [vmem:[%s466 + $0x18] sm:$0xff]
      %503 = vst [vmem:[#allocation2] sm:$0xff] %v499
      %504 = vst [vmem:[#allocation2 + $0x8] sm:$0xff] %v500
      %505 = vst [vmem:[#allocation2 + $0x10] sm:$0xff] %v501
      %506 = vst [vmem:[#allocation2 + $0x18] sm:$0xff] %v502
      %v507 = vld [vmem:[%s476] sm:$0xf]
      %v508 = vld [vmem:[%s3] sm:$0xff]
      %v509 = vld [vmem:[%s3 + $0x8] sm:$0xff]
      %511 = vset.pattern.permute.xlu0 0
      %512 = vperm.xlu0 %511, %v508
      %v513 = vpop.permute.xlu0 %512
      %516 = vset.pattern.permute.xlu0 0
      %517 = vperm.xlu0 %516, %v509
      %v518 = vpop.permute.xlu0 %517
      %v521 = vperm.slane %v507, 0
      %v522 = vperm.slane %v507, 2
      %v525 = vperm.slane %v521, 0
      %v526 = vperm.slane %v522, 0
      %v527 = vmul.f32 %v513, %v525
      %v528 = vmul.f32 %v513, %v526
      %v529 = vmul.f32 %v518, %v525
      %v530 = vmul.f32 %v518, %v526
      %531 = vset.pattern.permute.xlu0 1
      %532 = vperm.xlu0 %531, %v508
      %v533 = vpop.permute.xlu0 %532
      %535 = vset.pattern.permute.xlu0 1
      %536 = vperm.xlu0 %535, %v509
      %v537 = vpop.permute.xlu0 %536
      %v539 = vperm.slane %v507, 1
      %v540 = vperm.slane %v507, 3
      %v543 = vperm.slane %v539, 1
      %v544 = vperm.slane %v540, 1
      %v545 = vmul.f32 %v533, %v543
      %v546 = vmul.f32 %v533, %v544
      %v547 = vmul.f32 %v537, %v543
      %v548 = vmul.f32 %v537, %v544
      %v549 = vadd.f32 %v527, %v545
      %v550 = vadd.f32 %v528, %v546
      %v551 = vadd.f32 %v529, %v547
      %v552 = vadd.f32 %v530, %v548
      %553 = vset.pattern.permute.xlu0 2
      %554 = vperm.xlu0 %553, %v508
      %v555 = vpop.permute.xlu0 %554
      %557 = vset.pattern.permute.xlu0 2
      %558 = vperm.xlu0 %557, %v509
      %v559 = vpop.permute.xlu0 %558
      %v561 = vsub.f32 %v549, %v555
      %v562 = vsub.f32 %v550, %v555
      %v563 = vsub.f32 %v551, %v559
      %v564 = vsub.f32 %v552, %v559
      %v565 = vand.u32 2147483647, %v561
      %vm566 = vcmp.le.f32.partialorder %v565, 0.7853982
      %vm567 = vcmp.lt.s32.totalorder %v561, 0
      %v568 = vand.u32 %v561, 2139095040
      %v569 = vshrl.u32 %v568, 23
      %v570 = vsub.s32 %v569, 127
      %v571 = vand.u32 2147483647, %v561
      %v572 = vand.u32 %v571, 8388607
      %v573 = vor.u32 %v572, 8388608
      %v574 = vsub.s32 0, %v573
      %v575 = vadd.s32 %v570, 1
      %vm576 = vcmp.gt.s32.totalorder %v575, 0
      %v577 = vsel %vm576, %v575, 0
      %v578 = vshrl.u32 %v577, 5
      %v579 = vand.u32 %v577, 31
      %v580 = vsub.s32 32, %v579
      %v581 = vshrl.u32 683565275, %v580
      %v582 = vshll.u32 683565275, %v579
      %v583 = vshrl.u32 2475754826, %v580
      %v584 = vor.u32 %v582, %v583
      %v585 = vshll.u32 2475754826, %v579
      %v586 = vshrl.u32 2131351028, %v580
      %v587 = vor.u32 %v585, %v586
      %v588 = vshll.u32 2131351028, %v579
      %v589 = vshrl.u32 2102212464, %v580
      %v590 = vor.u32 %v588, %v589
      %v591 = vshll.u32 2102212464, %v579
      %v592 = vshrl.u32 920167782, %v580
      %v593 = vor.u32 %v591, %v592
      %v594 = vshll.u32 920167782, %v579
      %v595 = vshrl.u32 1326507024, %v580
      %v596 = vor.u32 %v594, %v595
      %vm597 = vcmp.lt.s32.totalorder %v578, 1
      %vm598 = vcmp.lt.s32.totalorder %v578, 2
      %vm599 = vcmp.lt.s32.totalorder %v578, 3
      %vm600 = vcmp.lt.s32.totalorder %v578, 4
      %v601 = vsel %vm597, %v581, %v584
      %v602 = vsel %vm600, %v590, 2102212464
      %v603 = vsel %vm599, %v587, %v602
      %v604 = vsel %vm598, %v601, %v603
      %v605 = vsel %vm597, %v584, %v587
      %v606 = vsel %vm600, %v593, 920167782
      %v607 = vsel %vm599, %v590, %v606
      %v608 = vsel %vm598, %v605, %v607
      %v609 = vsel %vm597, %v587, %v590
      %v610 = vsel %vm600, %v596, 1326507024
      %v611 = vsel %vm599, %v593, %v610
      %v612 = vsel %vm598, %v609, %v611
      %v613 = vshll.u32 %v573, 8
      %v614 = vand.u32 %v613, 65535
      %v615 = vshrl.u32 %v613, 16
      %v616 = vand.u32 %v612, 65535
      %v617 = vshrl.u32 %v612, 16
      %v618 = vmul.u32 %v614, %v616
      %v619 = vmul.u32 %v614, %v617
      %v620 = vmul.u32 %v615, %v616
      %v621 = vmul.u32 %v615, %v617
      %v622 = vshll.u32 %v619, 16
      %v623 = vshrl.u32 %v619, 16
      %v624 = vshll.u32 %v620, 16
      %v625 = vshrl.u32 %v620, 16
      %vm626 = vc.u32 %v618, %v622
      %v627 = vsel %vm626, 1, 0
      %v628 = vadd.s32 %v618, %v622
      %v629 = vadd.s32 %v621, %v627
      %vm630 = vc.u32 %v628, %v624
      %v631 = vsel %vm630, 1, 0
      %v632 = vadd.s32 %v628, %v624
      %v633 = vadd.s32 %v629, %v631
      %v634 = vadd.s32 %v633, %v623
      %v635 = vadd.s32 %v634, %v625
      %v636 = vand.u32 %v613, 65535
      %v637 = vshrl.u32 %v613, 16
      %v638 = vand.u32 %v608, 65535
      %v639 = vshrl.u32 %v608, 16
      %v640 = vmul.u32 %v636, %v638
      %v641 = vmul.u32 %v636, %v639
      %v642 = vmul.u32 %v637, %v638
      %v643 = vmul.u32 %v637, %v639
      %v644 = vshll.u32 %v641, 16
      %v645 = vshrl.u32 %v641, 16
      %v646 = vshll.u32 %v642, 16
      %v647 = vshrl.u32 %v642, 16
      %vm648 = vc.u32 %v640, %v644
      %v649 = vsel %vm648, 1, 0
      %v650 = vadd.s32 %v640, %v644
      %v651 = vadd.s32 %v643, %v649
      %vm652 = vc.u32 %v650, %v646
      %v653 = vsel %vm652, 1, 0
      %v654 = vadd.s32 %v650, %v646
      %v655 = vadd.s32 %v651, %v653
      %v656 = vadd.s32 %v655, %v645
      %v657 = vadd.s32 %v656, %v647
      %v658 = vmul.u32 %v613, %v604
      %v659 = vadd.s32 %v635, %v654
      %vm660 = vc.u32 %v635, %v654
      %v661 = vadd.s32 %v657, 1
      %v662 = vsel %vm660, %v661, %v657
      %v663 = vadd.s32 %v658, %v662
      %v664 = vadd.s32 %v663, 536870912
      %v665 = vshrl.u32 %v664, 30
      %v666 = vshll.u32 %v665, 30
      %v667 = vsub.s32 %v663, %v666
      %vm668 = vcmp.lt.s32.totalorder %v667, 0
      %v669 = vsub.s32 0, %v667
      %v670 = vsel %vm668, %v669, %v667
      %v671 = vclz %v670
      %v672 = vsub.s32 %v671, 2
      %vm673 = vcmp.gt.s32.totalorder 0, %v672
      %v674 = vsel %vm673, 0, %v672
      %v675 = vsub.s32 32, %v674
      %v676 = vshll.u32 %v667, %v674
      %v677 = vshrl.u32 %v659, %v675
      %v678 = vor.u32 %v676, %v677
      %v679 = vsub.s32 4294967266, %v674
      %v680 = vadd.s32 %v679, 127
      %v681 = vshll.u32 %v680, 23
      %v682 = vor.u32 4788187, %v681
      %v683 = vand.u32 2147483647, %v682
      %v685 = vcvt.s32.f32 %v678
      %v686 = vmul.f32 %v685, %v683
      %v687 = vxor.u32 %v686, 2147483648
      %v688 = vsel %vm567, %v687, %v686
      %v689 = vsub.s32 4, %v665
      %v690 = vsel %vm567, %v689, %v665
      %v691 = vsel %vm566, %v561, %v688
      %v692 = vsel %vm566, 0, %v690
      %v693 = vmul.f32 %v691, %v691
      %v694 = vmul.f32 %v693, -0.001358992
      %v695 = vadd.f32 %v694, 0.041655596
      %v696 = vmul.f32 %v693, %v695
      %v697 = vadd.f32 %v696, -0.4999988
      %v698 = vmul.f32 %v693, %v697
      %v699 = vadd.f32 1.0, %v698
      %v700 = vmul.f32 %v691, %v691
      %v701 = vmul.f32 %v700, -0.00019511016
      %v702 = vadd.f32 %v701, 0.008332121
      %v703 = vmul.f32 %v700, %v702
      %v704 = vadd.f32 %v703, -0.16666654
      %v705 = vmul.f32 %v700, %v704
      %v706 = vadd.f32 %v705, 1.0
      %v707 = vmul.f32 %v706, %v691
      %vm708 = vweird.f32 %v561
      %v709 = vand.u32 %v692, 3
      %vm710 = vcmp.lt.s32.totalorder %v709, 2
      %vm711 = vcmp.eq.s32.totalorder %v709, 0
      %v712 = vxor.u32 %v707, 2147483648
      %v713 = vsel %vm711, %v699, %v712
      %vm714 = vcmp.eq.s32.totalorder %v709, 2
      %v715 = vxor.u32 %v699, 2147483648
      %v716 = vsel %vm714, %v715, %v707
      %v717 = vsel %vm710, %v713, %v716
      %v718 = vsel %vm708, nan, %v717
      %v719 = vand.u32 2147483647, %v562
      %vm720 = vcmp.le.f32.partialorder %v719, 0.7853982
      %vm721 = vcmp.lt.s32.totalorder %v562, 0
      %v722 = vand.u32 %v562, 2139095040
      %v723 = vshrl.u32 %v722, 23
      %v724 = vsub.s32 %v723, 127
      %v725 = vand.u32 2147483647, %v562
      %v726 = vand.u32 %v725, 8388607
      %v727 = vor.u32 %v726, 8388608
      %v728 = vsub.s32 0, %v727
      %v729 = vadd.s32 %v724, 1
      %vm730 = vcmp.gt.s32.totalorder %v729, 0
      %v731 = vsel %vm730, %v729, 0
      %v732 = vshrl.u32 %v731, 5
      %v733 = vand.u32 %v731, 31
      %v734 = vsub.s32 32, %v733
      %v735 = vshrl.u32 683565275, %v734
      %v736 = vshll.u32 683565275, %v733
      %v737 = vshrl.u32 2475754826, %v734
      %v738 = vor.u32 %v736, %v737
      %v739 = vshll.u32 2475754826, %v733
      %v740 = vshrl.u32 2131351028, %v734
      %v741 = vor.u32 %v739, %v740
      %v742 = vshll.u32 2131351028, %v733
      %v743 = vshrl.u32 2102212464, %v734
      %v744 = vor.u32 %v742, %v743
      %v745 = vshll.u32 2102212464, %v733
      %v746 = vshrl.u32 920167782, %v734
      %v747 = vor.u32 %v745, %v746
      %v748 = vshll.u32 920167782, %v733
      %v749 = vshrl.u32 1326507024, %v734
      %v750 = vor.u32 %v748, %v749
      %vm751 = vcmp.lt.s32.totalorder %v732, 1
      %vm752 = vcmp.lt.s32.totalorder %v732, 2
      %vm753 = vcmp.lt.s32.totalorder %v732, 3
      %vm754 = vcmp.lt.s32.totalorder %v732, 4
      %v755 = vsel %vm751, %v735, %v738
      %v756 = vsel %vm754, %v744, 2102212464
      %v757 = vsel %vm753, %v741, %v756
      %v758 = vsel %vm752, %v755, %v757
      %v759 = vsel %vm751, %v738, %v741
      %v760 = vsel %vm754, %v747, 920167782
      %v761 = vsel %vm753, %v744, %v760
      %v762 = vsel %vm752, %v759, %v761
      %v763 = vsel %vm751, %v741, %v744
      %v764 = vsel %vm754, %v750, 1326507024
      %v765 = vsel %vm753, %v747, %v764
      %v766 = vsel %vm752, %v763, %v765
      %v767 = vshll.u32 %v727, 8
      %v768 = vand.u32 %v767, 65535
      %v769 = vshrl.u32 %v767, 16
      %v770 = vand.u32 %v766, 65535
      %v771 = vshrl.u32 %v766, 16
      %v772 = vmul.u32 %v768, %v770
      %v773 = vmul.u32 %v768, %v771
      %v774 = vmul.u32 %v769, %v770
      %v775 = vmul.u32 %v769, %v771
      %v776 = vshll.u32 %v773, 16
      %v777 = vshrl.u32 %v773, 16
      %v778 = vshll.u32 %v774, 16
      %v779 = vshrl.u32 %v774, 16
      %vm780 = vc.u32 %v772, %v776
      %v781 = vsel %vm780, 1, 0
      %v782 = vadd.s32 %v772, %v776
      %v783 = vadd.s32 %v775, %v781
      %vm784 = vc.u32 %v782, %v778
      %v785 = vsel %vm784, 1, 0
      %v786 = vadd.s32 %v782, %v778
      %v787 = vadd.s32 %v783, %v785
      %v788 = vadd.s32 %v787, %v777
      %v789 = vadd.s32 %v788, %v779
      %v790 = vand.u32 %v767, 65535
      %v791 = vshrl.u32 %v767, 16
      %v792 = vand.u32 %v762, 65535
      %v793 = vshrl.u32 %v762, 16
      %v794 = vmul.u32 %v790, %v792
      %v795 = vmul.u32 %v790, %v793
      %v796 = vmul.u32 %v791, %v792
      %v797 = vmul.u32 %v791, %v793
      %v798 = vshll.u32 %v795, 16
      %v799 = vshrl.u32 %v795, 16
      %v800 = vshll.u32 %v796, 16
      %v801 = vshrl.u32 %v796, 16
      %vm802 = vc.u32 %v794, %v798
      %v803 = vsel %vm802, 1, 0
      %v804 = vadd.s32 %v794, %v798
      %v805 = vadd.s32 %v797, %v803
      %vm806 = vc.u32 %v804, %v800
      %v807 = vsel %vm806, 1, 0
      %v808 = vadd.s32 %v804, %v800
      %v809 = vadd.s32 %v805, %v807
      %v810 = vadd.s32 %v809, %v799
      %v811 = vadd.s32 %v810, %v801
      %v812 = vmul.u32 %v767, %v758
      %v813 = vadd.s32 %v789, %v808
      %vm814 = vc.u32 %v789, %v808
      %v815 = vadd.s32 %v811, 1
      %v816 = vsel %vm814, %v815, %v811
      %v817 = vadd.s32 %v812, %v816
      %v818 = vadd.s32 %v817, 536870912
      %v819 = vshrl.u32 %v818, 30
      %v820 = vshll.u32 %v819, 30
      %v821 = vsub.s32 %v817, %v820
      %vm822 = vcmp.lt.s32.totalorder %v821, 0
      %v823 = vsub.s32 0, %v821
      %v824 = vsel %vm822, %v823, %v821
      %v825 = vclz %v824
      %v826 = vsub.s32 %v825, 2
      %vm827 = vcmp.gt.s32.totalorder 0, %v826
      %v828 = vsel %vm827, 0, %v826
      %v829 = vsub.s32 32, %v828
      %v830 = vshll.u32 %v821, %v828
      %v831 = vshrl.u32 %v813, %v829
      %v832 = vor.u32 %v830, %v831
      %v833 = vsub.s32 4294967266, %v828
      %v834 = vadd.s32 %v833, 127
      %v835 = vshll.u32 %v834, 23
      %v836 = vor.u32 4788187, %v835
      %v837 = vand.u32 2147483647, %v836
      %v839 = vcvt.s32.f32 %v832
      %v840 = vmul.f32 %v839, %v837
      %v841 = vxor.u32 %v840, 2147483648
      %v842 = vsel %vm721, %v841, %v840
      %v843 = vsub.s32 4, %v819
      %v844 = vsel %vm721, %v843, %v819
      %v845 = vsel %vm720, %v562, %v842
      %v846 = vsel %vm720, 0, %v844
      %v847 = vmul.f32 %v845, %v845
      %v848 = vmul.f32 %v847, -0.001358992
      %v849 = vadd.f32 %v848, 0.041655596
      %v850 = vmul.f32 %v847, %v849
      %v851 = vadd.f32 %v850, -0.4999988
      %v852 = vmul.f32 %v847, %v851
      %v853 = vadd.f32 1.0, %v852
      %v854 = vmul.f32 %v845, %v845
      %v855 = vmul.f32 %v854, -0.00019511016
      %v856 = vadd.f32 %v855, 0.008332121
      %v857 = vmul.f32 %v854, %v856
      %v858 = vadd.f32 %v857, -0.16666654
      %v859 = vmul.f32 %v854, %v858
      %v860 = vadd.f32 %v859, 1.0
      %v861 = vmul.f32 %v860, %v845
      %vm862 = vweird.f32 %v562
      %v863 = vand.u32 %v846, 3
      %vm864 = vcmp.lt.s32.totalorder %v863, 2
      %vm865 = vcmp.eq.s32.totalorder %v863, 0
      %v866 = vxor.u32 %v861, 2147483648
      %v867 = vsel %vm865, %v853, %v866
      %vm868 = vcmp.eq.s32.totalorder %v863, 2
      %v869 = vxor.u32 %v853, 2147483648
      %v870 = vsel %vm868, %v869, %v861
      %v871 = vsel %vm864, %v867, %v870
      %v872 = vsel %vm862, nan, %v871
      %v873 = vand.u32 2147483647, %v563
      %vm874 = vcmp.le.f32.partialorder %v873, 0.7853982
      %vm875 = vcmp.lt.s32.totalorder %v563, 0
      %v876 = vand.u32 %v563, 2139095040
      %v877 = vshrl.u32 %v876, 23
      %v878 = vsub.s32 %v877, 127
      %v879 = vand.u32 2147483647, %v563
      %v880 = vand.u32 %v879, 8388607
      %v881 = vor.u32 %v880, 8388608
      %v882 = vsub.s32 0, %v881
      %v883 = vadd.s32 %v878, 1
      %vm884 = vcmp.gt.s32.totalorder %v883, 0
      %v885 = vsel %vm884, %v883, 0
      %v886 = vshrl.u32 %v885, 5
      %v887 = vand.u32 %v885, 31
      %v888 = vsub.s32 32, %v887
      %v889 = vshrl.u32 683565275, %v888
      %v890 = vshll.u32 683565275, %v887
      %v891 = vshrl.u32 2475754826, %v888
      %v892 = vor.u32 %v890, %v891
      %v893 = vshll.u32 2475754826, %v887
      %v894 = vshrl.u32 2131351028, %v888
      %v895 = vor.u32 %v893, %v894
      %v896 = vshll.u32 2131351028, %v887
      %v897 = vshrl.u32 2102212464, %v888
      %v898 = vor.u32 %v896, %v897
      %v899 = vshll.u32 2102212464, %v887
      %v900 = vshrl.u32 920167782, %v888
      %v901 = vor.u32 %v899, %v900
      %v902 = vshll.u32 920167782, %v887
      %v903 = vshrl.u32 1326507024, %v888
      %v904 = vor.u32 %v902, %v903
      %vm905 = vcmp.lt.s32.totalorder %v886, 1
      %vm906 = vcmp.lt.s32.totalorder %v886, 2
      %vm907 = vcmp.lt.s32.totalorder %v886, 3
      %vm908 = vcmp.lt.s32.totalorder %v886, 4
      %v909 = vsel %vm905, %v889, %v892
      %v910 = vsel %vm908, %v898, 2102212464
      %v911 = vsel %vm907, %v895, %v910
      %v912 = vsel %vm906, %v909, %v911
      %v913 = vsel %vm905, %v892, %v895
      %v914 = vsel %vm908, %v901, 920167782
      %v915 = vsel %vm907, %v898, %v914
      %v916 = vsel %vm906, %v913, %v915
      %v917 = vsel %vm905, %v895, %v898
      %v918 = vsel %vm908, %v904, 1326507024
      %v919 = vsel %vm907, %v901, %v918
      %v920 = vsel %vm906, %v917, %v919
      %v921 = vshll.u32 %v881, 8
      %v922 = vand.u32 %v921, 65535
      %v923 = vshrl.u32 %v921, 16
      %v924 = vand.u32 %v920, 65535
      %v925 = vshrl.u32 %v920, 16
      %v926 = vmul.u32 %v922, %v924
      %v927 = vmul.u32 %v922, %v925
      %v928 = vmul.u32 %v923, %v924
      %v929 = vmul.u32 %v923, %v925
      %v930 = vshll.u32 %v927, 16
      %v931 = vshrl.u32 %v927, 16
      %v932 = vshll.u32 %v928, 16
      %v933 = vshrl.u32 %v928, 16
      %vm934 = vc.u32 %v926, %v930
      %v935 = vsel %vm934, 1, 0
      %v936 = vadd.s32 %v926, %v930
      %v937 = vadd.s32 %v929, %v935
      %vm938 = vc.u32 %v936, %v932
      %v939 = vsel %vm938, 1, 0
      %v940 = vadd.s32 %v936, %v932
      %v941 = vadd.s32 %v937, %v939
      %v942 = vadd.s32 %v941, %v931
      %v943 = vadd.s32 %v942, %v933
      %v944 = vand.u32 %v921, 65535
      %v945 = vshrl.u32 %v921, 16
      %v946 = vand.u32 %v916, 65535
      %v947 = vshrl.u32 %v916, 16
      %v948 = vmul.u32 %v944, %v946
      %v949 = vmul.u32 %v944, %v947
      %v950 = vmul.u32 %v945, %v946
      %v951 = vmul.u32 %v945, %v947
      %v952 = vshll.u32 %v949, 16
      %v953 = vshrl.u32 %v949, 16
      %v954 = vshll.u32 %v950, 16
      %v955 = vshrl.u32 %v950, 16
      %vm956 = vc.u32 %v948, %v952
      %v957 = vsel %vm956, 1, 0
      %v958 = vadd.s32 %v948, %v952
      %v959 = vadd.s32 %v951, %v957
      %vm960 = vc.u32 %v958, %v954
      %v961 = vsel %vm960, 1, 0
      %v962 = vadd.s32 %v958, %v954
      %v963 = vadd.s32 %v959, %v961
      %v964 = vadd.s32 %v963, %v953
      %v965 = vadd.s32 %v964, %v955
      %v966 = vmul.u32 %v921, %v912
      %v967 = vadd.s32 %v943, %v962
      %vm968 = vc.u32 %v943, %v962
      %v969 = vadd.s32 %v965, 1
      %v970 = vsel %vm968, %v969, %v965
      %v971 = vadd.s32 %v966, %v970
      %v972 = vadd.s32 %v971, 536870912
      %v973 = vshrl.u32 %v972, 30
      %v974 = vshll.u32 %v973, 30
      %v975 = vsub.s32 %v971, %v974
      %vm976 = vcmp.lt.s32.totalorder %v975, 0
      %v977 = vsub.s32 0, %v975
      %v978 = vsel %vm976, %v977, %v975
      %v979 = vclz %v978
      %v980 = vsub.s32 %v979, 2
      %vm981 = vcmp.gt.s32.totalorder 0, %v980
      %v982 = vsel %vm981, 0, %v980
      %v983 = vsub.s32 32, %v982
      %v984 = vshll.u32 %v975, %v982
      %v985 = vshrl.u32 %v967, %v983
      %v986 = vor.u32 %v984, %v985
      %v987 = vsub.s32 4294967266, %v982
      %v988 = vadd.s32 %v987, 127
      %v989 = vshll.u32 %v988, 23
      %v990 = vor.u32 4788187, %v989
      %v991 = vand.u32 2147483647, %v990
      %v993 = vcvt.s32.f32 %v986
      %v994 = vmul.f32 %v993, %v991
      %v995 = vxor.u32 %v994, 2147483648
      %v996 = vsel %vm875, %v995, %v994
      %v997 = vsub.s32 4, %v973
      %v998 = vsel %vm875, %v997, %v973
      %v999 = vsel %vm874, %v563, %v996
      %v1000 = vsel %vm874, 0, %v998
      %v1001 = vmul.f32 %v999, %v999
      %v1002 = vmul.f32 %v1001, -0.001358992
      %v1003 = vadd.f32 %v1002, 0.041655596
      %v1004 = vmul.f32 %v1001, %v1003
      %v1005 = vadd.f32 %v1004, -0.4999988
      %v1006 = vmul.f32 %v1001, %v1005
      %v1007 = vadd.f32 1.0, %v1006
      %v1008 = vmul.f32 %v999, %v999
      %v1009 = vmul.f32 %v1008, -0.00019511016
      %v1010 = vadd.f32 %v1009, 0.008332121
      %v1011 = vmul.f32 %v1008, %v1010
      %v1012 = vadd.f32 %v1011, -0.16666654
      %v1013 = vmul.f32 %v1008, %v1012
      %v1014 = vadd.f32 %v1013, 1.0
      %v1015 = vmul.f32 %v1014, %v999
      %vm1016 = vweird.f32 %v563
      %v1017 = vand.u32 %v1000, 3
      %vm1018 = vcmp.lt.s32.totalorder %v1017, 2
      %vm1019 = vcmp.eq.s32.totalorder %v1017, 0
      %v1020 = vxor.u32 %v1015, 2147483648
      %v1021 = vsel %vm1019, %v1007, %v1020
      %vm1022 = vcmp.eq.s32.totalorder %v1017, 2
      %v1023 = vxor.u32 %v1007, 2147483648
      %v1024 = vsel %vm1022, %v1023, %v1015
      %v1025 = vsel %vm1018, %v1021, %v1024
      %v1026 = vsel %vm1016, nan, %v1025
      %v1027 = vand.u32 2147483647, %v564
      %vm1028 = vcmp.le.f32.partialorder %v1027, 0.7853982
      %vm1029 = vcmp.lt.s32.totalorder %v564, 0
      %v1030 = vand.u32 %v564, 2139095040
      %v1031 = vshrl.u32 %v1030, 23
      %v1032 = vsub.s32 %v1031, 127
      %v1033 = vand.u32 2147483647, %v564
      %v1034 = vand.u32 %v1033, 8388607
      %v1035 = vor.u32 %v1034, 8388608
      %v1036 = vsub.s32 0, %v1035
      %v1037 = vadd.s32 %v1032, 1
      %vm1038 = vcmp.gt.s32.totalorder %v1037, 0
      %v1039 = vsel %vm1038, %v1037, 0
      %v1040 = vshrl.u32 %v1039, 5
      %v1041 = vand.u32 %v1039, 31
      %v1042 = vsub.s32 32, %v1041
      %v1043 = vshrl.u32 683565275, %v1042
      %v1044 = vshll.u32 683565275, %v1041
      %v1045 = vshrl.u32 2475754826, %v1042
      %v1046 = vor.u32 %v1044, %v1045
      %v1047 = vshll.u32 2475754826, %v1041
      %v1048 = vshrl.u32 2131351028, %v1042
      %v1049 = vor.u32 %v1047, %v1048
      %v1050 = vshll.u32 2131351028, %v1041
      %v1051 = vshrl.u32 2102212464, %v1042
      %v1052 = vor.u32 %v1050, %v1051
      %v1053 = vshll.u32 2102212464, %v1041
      %v1054 = vshrl.u32 920167782, %v1042
      %v1055 = vor.u32 %v1053, %v1054
      %v1056 = vshll.u32 920167782, %v1041
      %v1057 = vshrl.u32 1326507024, %v1042
      %v1058 = vor.u32 %v1056, %v1057
      %vm1059 = vcmp.lt.s32.totalorder %v1040, 1
      %vm1060 = vcmp.lt.s32.totalorder %v1040, 2
      %vm1061 = vcmp.lt.s32.totalorder %v1040, 3
      %vm1062 = vcmp.lt.s32.totalorder %v1040, 4
      %v1063 = vsel %vm1059, %v1043, %v1046
      %v1064 = vsel %vm1062, %v1052, 2102212464
      %v1065 = vsel %vm1061, %v1049, %v1064
      %v1066 = vsel %vm1060, %v1063, %v1065
      %v1067 = vsel %vm1059, %v1046, %v1049
      %v1068 = vsel %vm1062, %v1055, 920167782
      %v1069 = vsel %vm1061, %v1052, %v1068
      %v1070 = vsel %vm1060, %v1067, %v1069
      %v1071 = vsel %vm1059, %v1049, %v1052
      %v1072 = vsel %vm1062, %v1058, 1326507024
      %v1073 = vsel %vm1061, %v1055, %v1072
      %v1074 = vsel %vm1060, %v1071, %v1073
      %v1075 = vshll.u32 %v1035, 8
      %v1076 = vand.u32 %v1075, 65535
      %v1077 = vshrl.u32 %v1075, 16
      %v1078 = vand.u32 %v1074, 65535
      %v1079 = vshrl.u32 %v1074, 16
      %v1080 = vmul.u32 %v1076, %v1078
      %v1081 = vmul.u32 %v1076, %v1079
      %v1082 = vmul.u32 %v1077, %v1078
      %v1083 = vmul.u32 %v1077, %v1079
      %v1084 = vshll.u32 %v1081, 16
      %v1085 = vshrl.u32 %v1081, 16
      %v1086 = vshll.u32 %v1082, 16
      %v1087 = vshrl.u32 %v1082, 16
      %vm1088 = vc.u32 %v1080, %v1084
      %v1089 = vsel %vm1088, 1, 0
      %v1090 = vadd.s32 %v1080, %v1084
      %v1091 = vadd.s32 %v1083, %v1089
      %vm1092 = vc.u32 %v1090, %v1086
      %v1093 = vsel %vm1092, 1, 0
      %v1094 = vadd.s32 %v1090, %v1086
      %v1095 = vadd.s32 %v1091, %v1093
      %v1096 = vadd.s32 %v1095, %v1085
      %v1097 = vadd.s32 %v1096, %v1087
      %v1098 = vand.u32 %v1075, 65535
      %v1099 = vshrl.u32 %v1075, 16
      %v1100 = vand.u32 %v1070, 65535
      %v1101 = vshrl.u32 %v1070, 16
      %v1102 = vmul.u32 %v1098, %v1100
      %v1103 = vmul.u32 %v1098, %v1101
      %v1104 = vmul.u32 %v1099, %v1100
      %v1105 = vmul.u32 %v1099, %v1101
      %v1106 = vshll.u32 %v1103, 16
      %v1107 = vshrl.u32 %v1103, 16
      %v1108 = vshll.u32 %v1104, 16
      %v1109 = vshrl.u32 %v1104, 16
      %vm1110 = vc.u32 %v1102, %v1106
      %v1111 = vsel %vm1110, 1, 0
      %v1112 = vadd.s32 %v1102, %v1106
      %v1113 = vadd.s32 %v1105, %v1111
      %vm1114 = vc.u32 %v1112, %v1108
      %v1115 = vsel %vm1114, 1, 0
      %v1116 = vadd.s32 %v1112, %v1108
      %v1117 = vadd.s32 %v1113, %v1115
      %v1118 = vadd.s32 %v1117, %v1107
      %v1119 = vadd.s32 %v1118, %v1109
      %v1120 = vmul.u32 %v1075, %v1066
      %v1121 = vadd.s32 %v1097, %v1116
      %vm1122 = vc.u32 %v1097, %v1116
      %v1123 = vadd.s32 %v1119, 1
      %v1124 = vsel %vm1122, %v1123, %v1119
      %v1125 = vadd.s32 %v1120, %v1124
      %v1126 = vadd.s32 %v1125, 536870912
      %v1127 = vshrl.u32 %v1126, 30
      %v1128 = vshll.u32 %v1127, 30
      %v1129 = vsub.s32 %v1125, %v1128
      %vm1130 = vcmp.lt.s32.totalorder %v1129, 0
      %v1131 = vsub.s32 0, %v1129
      %v1132 = vsel %vm1130, %v1131, %v1129
      %v1133 = vclz %v1132
      %v1134 = vsub.s32 %v1133, 2
      %vm1135 = vcmp.gt.s32.totalorder 0, %v1134
      %v1136 = vsel %vm1135, 0, %v1134
      %v1137 = vsub.s32 32, %v1136
      %v1138 = vshll.u32 %v1129, %v1136
      %v1139 = vshrl.u32 %v1121, %v1137
      %v1140 = vor.u32 %v1138, %v1139
      %v1141 = vsub.s32 4294967266, %v1136
      %v1142 = vadd.s32 %v1141, 127
      %v1143 = vshll.u32 %v1142, 23
      %v1144 = vor.u32 4788187, %v1143
      %v1145 = vand.u32 2147483647, %v1144
      %v1147 = vcvt.s32.f32 %v1140
      %v1148 = vmul.f32 %v1147, %v1145
      %v1149 = vxor.u32 %v1148, 2147483648
      %v1150 = vsel %vm1029, %v1149, %v1148
      %v1151 = vsub.s32 4, %v1127
      %v1152 = vsel %vm1029, %v1151, %v1127
      %v1153 = vsel %vm1028, %v564, %v1150
      %v1154 = vsel %vm1028, 0, %v1152
      %v1155 = vmul.f32 %v1153, %v1153
      %v1156 = vmul.f32 %v1155, -0.001358992
      %v1157 = vadd.f32 %v1156, 0.041655596
      %v1158 = vmul.f32 %v1155, %v1157
      %v1159 = vadd.f32 %v1158, -0.4999988
      %v1160 = vmul.f32 %v1155, %v1159
      %v1161 = vadd.f32 1.0, %v1160
      %v1162 = vmul.f32 %v1153, %v1153
      %v1163 = vmul.f32 %v1162, -0.00019511016
      %v1164 = vadd.f32 %v1163, 0.008332121
      %v1165 = vmul.f32 %v1162, %v1164
      %v1166 = vadd.f32 %v1165, -0.16666654
      %v1167 = vmul.f32 %v1162, %v1166
      %v1168 = vadd.f32 %v1167, 1.0
      %v1169 = vmul.f32 %v1168, %v1153
      %vm1170 = vweird.f32 %v564
      %v1171 = vand.u32 %v1154, 3
      %vm1172 = vcmp.lt.s32.totalorder %v1171, 2
      %vm1173 = vcmp.eq.s32.totalorder %v1171, 0
      %v1174 = vxor.u32 %v1169, 2147483648
      %v1175 = vsel %vm1173, %v1161, %v1174
      %vm1176 = vcmp.eq.s32.totalorder %v1171, 2
      %v1177 = vxor.u32 %v1161, 2147483648
      %v1178 = vsel %vm1176, %v1177, %v1169
      %v1179 = vsel %vm1172, %v1175, %v1178
      %v1180 = vsel %vm1170, nan, %v1179
      %v1181 = vpack.c.bf16 %v872, %v718
      %v1182 = vpack.c.bf16 %v1180, %v1026
      %1183 = vst [vmem:[#allocation2 + $0x20] sm:$0xff] %v1181
      %1184 = vst [vmem:[#allocation2 + $0x28] sm:$0xff] %v1182
      %v1185 = vld [vmem:[%s486] sm:$0xf]
      %v1186 = vld [vmem:[%s4] sm:$0xff]
      %v1187 = vld [vmem:[%s4 + $0x8] sm:$0xff]
      %1189 = vset.pattern.permute.xlu0 0
      %1190 = vperm.xlu0 %1189, %v1186
      %v1191 = vpop.permute.xlu0 %1190
      %1194 = vset.pattern.permute.xlu0 0
      %1195 = vperm.xlu0 %1194, %v1187
      %v1196 = vpop.permute.xlu0 %1195
      %v1199 = vperm.slane %v1185, 0
      %v1200 = vperm.slane %v1185, 2
      %v1203 = vperm.slane %v1199, 0
      %v1204 = vperm.slane %v1200, 0
      %v1205 = vmul.f32 %v1191, %v1203
      %v1206 = vmul.f32 %v1191, %v1204
      %v1207 = vmul.f32 %v1196, %v1203
      %v1208 = vmul.f32 %v1196, %v1204
      %1209 = vset.pattern.permute.xlu0 1
      %1210 = vperm.xlu0 %1209, %v1186
      %v1211 = vpop.permute.xlu0 %1210
      %1213 = vset.pattern.permute.xlu0 1
      %1214 = vperm.xlu0 %1213, %v1187
      %v1215 = vpop.permute.xlu0 %1214
      %v1217 = vperm.slane %v1185, 1
      %v1218 = vperm.slane %v1185, 3
      %v1221 = vperm.slane %v1217, 1
      %v1222 = vperm.slane %v1218, 1
      %v1223 = vmul.f32 %v1211, %v1221
      %v1224 = vmul.f32 %v1211, %v1222
      %v1225 = vmul.f32 %v1215, %v1221
      %v1226 = vmul.f32 %v1215, %v1222
      %v1227 = vadd.f32 %v1205, %v1223
      %v1228 = vadd.f32 %v1206, %v1224
      %v1229 = vadd.f32 %v1207, %v1225
      %v1230 = vadd.f32 %v1208, %v1226
      %1231 = vset.pattern.permute.xlu0 2
      %1232 = vperm.xlu0 %1231, %v1186
      %v1233 = vpop.permute.xlu0 %1232
      %1235 = vset.pattern.permute.xlu0 2
      %1236 = vperm.xlu0 %1235, %v1187
      %v1237 = vpop.permute.xlu0 %1236
      %v1239 = vsub.f32 %v1227, %v1233
      %v1240 = vsub.f32 %v1228, %v1233
      %v1241 = vsub.f32 %v1229, %v1237
      %v1242 = vsub.f32 %v1230, %v1237
      %v1243 = vand.u32 2147483647, %v1239
      %vm1244 = vcmp.le.f32.partialorder %v1243, 0.7853982
      %vm1245 = vcmp.lt.s32.totalorder %v1239, 0
      %v1246 = vand.u32 %v1239, 2139095040
      %v1247 = vshrl.u32 %v1246, 23
      %v1248 = vsub.s32 %v1247, 127
      %v1249 = vand.u32 2147483647, %v1239
      %v1250 = vand.u32 %v1249, 8388607
      %v1251 = vor.u32 %v1250, 8388608
      %v1252 = vsub.s32 0, %v1251
      %v1253 = vadd.s32 %v1248, 1
      %vm1254 = vcmp.gt.s32.totalorder %v1253, 0
      %v1255 = vsel %vm1254, %v1253, 0
      %v1256 = vshrl.u32 %v1255, 5
      %v1257 = vand.u32 %v1255, 31
      %v1258 = vsub.s32 32, %v1257
      %v1259 = vshrl.u32 683565275, %v1258
      %v1260 = vshll.u32 683565275, %v1257
      %v1261 = vshrl.u32 2475754826, %v1258
      %v1262 = vor.u32 %v1260, %v1261
      %v1263 = vshll.u32 2475754826, %v1257
      %v1264 = vshrl.u32 2131351028, %v1258
      %v1265 = vor.u32 %v1263, %v1264
      %v1266 = vshll.u32 2131351028, %v1257
      %v1267 = vshrl.u32 2102212464, %v1258
      %v1268 = vor.u32 %v1266, %v1267
      %v1269 = vshll.u32 2102212464, %v1257
      %v1270 = vshrl.u32 920167782, %v1258
      %v1271 = vor.u32 %v1269, %v1270
      %v1272 = vshll.u32 920167782, %v1257
      %v1273 = vshrl.u32 1326507024, %v1258
      %v1274 = vor.u32 %v1272, %v1273
      %vm1275 = vcmp.lt.s32.totalorder %v1256, 1
      %vm1276 = vcmp.lt.s32.totalorder %v1256, 2
      %vm1277 = vcmp.lt.s32.totalorder %v1256, 3
      %vm1278 = vcmp.lt.s32.totalorder %v1256, 4
      %v1279 = vsel %vm1275, %v1259, %v1262
      %v1280 = vsel %vm1278, %v1268, 2102212464
      %v1281 = vsel %vm1277, %v1265, %v1280
      %v1282 = vsel %vm1276, %v1279, %v1281
      %v1283 = vsel %vm1275, %v1262, %v1265
      %v1284 = vsel %vm1278, %v1271, 920167782
      %v1285 = vsel %vm1277, %v1268, %v1284
      %v1286 = vsel %vm1276, %v1283, %v1285
      %v1287 = vsel %vm1275, %v1265, %v1268
      %v1288 = vsel %vm1278, %v1274, 1326507024
      %v1289 = vsel %vm1277, %v1271, %v1288
      %v1290 = vsel %vm1276, %v1287, %v1289
      %v1291 = vshll.u32 %v1251, 8
      %v1292 = vand.u32 %v1291, 65535
      %v1293 = vshrl.u32 %v1291, 16
      %v1294 = vand.u32 %v1290, 65535
      %v1295 = vshrl.u32 %v1290, 16
      %v1296 = vmul.u32 %v1292, %v1294
      %v1297 = vmul.u32 %v1292, %v1295
      %v1298 = vmul.u32 %v1293, %v1294
      %v1299 = vmul.u32 %v1293, %v1295
      %v1300 = vshll.u32 %v1297, 16
      %v1301 = vshrl.u32 %v1297, 16
      %v1302 = vshll.u32 %v1298, 16
      %v1303 = vshrl.u32 %v1298, 16
      %vm1304 = vc.u32 %v1296, %v1300
      %v1305 = vsel %vm1304, 1, 0
      %v1306 = vadd.s32 %v1296, %v1300
      %v1307 = vadd.s32 %v1299, %v1305
      %vm1308 = vc.u32 %v1306, %v1302
      %v1309 = vsel %vm1308, 1, 0
      %v1310 = vadd.s32 %v1306, %v1302
      %v1311 = vadd.s32 %v1307, %v1309
      %v1312 = vadd.s32 %v1311, %v1301
      %v1313 = vadd.s32 %v1312, %v1303
      %v1314 = vand.u32 %v1291, 65535
      %v1315 = vshrl.u32 %v1291, 16
      %v1316 = vand.u32 %v1286, 65535
      %v1317 = vshrl.u32 %v1286, 16
      %v1318 = vmul.u32 %v1314, %v1316
      %v1319 = vmul.u32 %v1314, %v1317
      %v1320 = vmul.u32 %v1315, %v1316
      %v1321 = vmul.u32 %v1315, %v1317
      %v1322 = vshll.u32 %v1319, 16
      %v1323 = vshrl.u32 %v1319, 16
      %v1324 = vshll.u32 %v1320, 16
      %v1325 = vshrl.u32 %v1320, 16
      %vm1326 = vc.u32 %v1318, %v1322
      %v1327 = vsel %vm1326, 1, 0
      %v1328 = vadd.s32 %v1318, %v1322
      %v1329 = vadd.s32 %v1321, %v1327
      %vm1330 = vc.u32 %v1328, %v1324
      %v1331 = vsel %vm1330, 1, 0
      %v1332 = vadd.s32 %v1328, %v1324
      %v1333 = vadd.s32 %v1329, %v1331
      %v1334 = vadd.s32 %v1333, %v1323
      %v1335 = vadd.s32 %v1334, %v1325
      %v1336 = vmul.u32 %v1291, %v1282
      %v1337 = vadd.s32 %v1313, %v1332
      %vm1338 = vc.u32 %v1313, %v1332
      %v1339 = vadd.s32 %v1335, 1
      %v1340 = vsel %vm1338, %v1339, %v1335
      %v1341 = vadd.s32 %v1336, %v1340
      %v1342 = vadd.s32 %v1341, 536870912
      %v1343 = vshrl.u32 %v1342, 30
      %v1344 = vshll.u32 %v1343, 30
      %v1345 = vsub.s32 %v1341, %v1344
      %vm1346 = vcmp.lt.s32.totalorder %v1345, 0
      %v1347 = vsub.s32 0, %v1345
      %v1348 = vsel %vm1346, %v1347, %v1345
      %v1349 = vclz %v1348
      %v1350 = vsub.s32 %v1349, 2
      %vm1351 = vcmp.gt.s32.totalorder 0, %v1350
      %v1352 = vsel %vm1351, 0, %v1350
      %v1353 = vsub.s32 32, %v1352
      %v1354 = vshll.u32 %v1345, %v1352
      %v1355 = vshrl.u32 %v1337, %v1353
      %v1356 = vor.u32 %v1354, %v1355
      %v1357 = vsub.s32 4294967266, %v1352
      %v1358 = vadd.s32 %v1357, 127
      %v1359 = vshll.u32 %v1358, 23
      %v1360 = vor.u32 4788187, %v1359
      %v1361 = vand.u32 2147483647, %v1360
      %v1363 = vcvt.s32.f32 %v1356
      %v1364 = vmul.f32 %v1363, %v1361
      %v1365 = vxor.u32 %v1364, 2147483648
      %v1366 = vsel %vm1245, %v1365, %v1364
      %v1367 = vsub.s32 4, %v1343
      %v1368 = vsel %vm1245, %v1367, %v1343
      %v1369 = vsel %vm1244, %v1239, %v1366
      %v1370 = vsel %vm1244, 0, %v1368
      %v1371 = vmul.f32 %v1369, %v1369
      %v1372 = vmul.f32 %v1371, -0.001358992
      %v1373 = vadd.f32 %v1372, 0.041655596
      %v1374 = vmul.f32 %v1371, %v1373
      %v1375 = vadd.f32 %v1374, -0.4999988
      %v1376 = vmul.f32 %v1371, %v1375
      %v1377 = vadd.f32 1.0, %v1376
      %v1378 = vmul.f32 %v1369, %v1369
      %v1379 = vmul.f32 %v1378, -0.00019511016
      %v1380 = vadd.f32 %v1379, 0.008332121
      %v1381 = vmul.f32 %v1378, %v1380
      %v1382 = vadd.f32 %v1381, -0.16666654
      %v1383 = vmul.f32 %v1378, %v1382
      %v1384 = vadd.f32 %v1383, 1.0
      %v1385 = vmul.f32 %v1384, %v1369
      %vm1386 = vweird.f32 %v1239
      %v1387 = vand.u32 %v1370, 3
      %vm1388 = vcmp.lt.s32.totalorder %v1387, 2
      %vm1389 = vcmp.eq.s32.totalorder %v1387, 0
      %v1390 = vxor.u32 %v1385, 2147483648
      %v1391 = vsel %vm1389, %v1377, %v1390
      %vm1392 = vcmp.eq.s32.totalorder %v1387, 2
      %v1393 = vxor.u32 %v1377, 2147483648
      %v1394 = vsel %vm1392, %v1393, %v1385
      %v1395 = vsel %vm1388, %v1391, %v1394
      %v1396 = vsel %vm1386, nan, %v1395
      %v1397 = vand.u32 2147483647, %v1240
      %vm1398 = vcmp.le.f32.partialorder %v1397, 0.7853982
      %vm1399 = vcmp.lt.s32.totalorder %v1240, 0
      %v1400 = vand.u32 %v1240, 2139095040
      %v1401 = vshrl.u32 %v1400, 23
      %v1402 = vsub.s32 %v1401, 127
      %v1403 = vand.u32 2147483647, %v1240
      %v1404 = vand.u32 %v1403, 8388607
      %v1405 = vor.u32 %v1404, 8388608
      %v1406 = vsub.s32 0, %v1405
      %v1407 = vadd.s32 %v1402, 1
      %vm1408 = vcmp.gt.s32.totalorder %v1407, 0
      %v1409 = vsel %vm1408, %v1407, 0
      %v1410 = vshrl.u32 %v1409, 5
      %v1411 = vand.u32 %v1409, 31
      %v1412 = vsub.s32 32, %v1411
      %v1413 = vshrl.u32 683565275, %v1412
      %v1414 = vshll.u32 683565275, %v1411
      %v1415 = vshrl.u32 2475754826, %v1412
      %v1416 = vor.u32 %v1414, %v1415
      %v1417 = vshll.u32 2475754826, %v1411
      %v1418 = vshrl.u32 2131351028, %v1412
      %v1419 = vor.u32 %v1417, %v1418
      %v1420 = vshll.u32 2131351028, %v1411
      %v1421 = vshrl.u32 2102212464, %v1412
      %v1422 = vor.u32 %v1420, %v1421
      %v1423 = vshll.u32 2102212464, %v1411
      %v1424 = vshrl.u32 920167782, %v1412
      %v1425 = vor.u32 %v1423, %v1424
      %v1426 = vshll.u32 920167782, %v1411
      %v1427 = vshrl.u32 1326507024, %v1412
      %v1428 = vor.u32 %v1426, %v1427
      %vm1429 = vcmp.lt.s32.totalorder %v1410, 1
      %vm1430 = vcmp.lt.s32.totalorder %v1410, 2
      %vm1431 = vcmp.lt.s32.totalorder %v1410, 3
      %vm1432 = vcmp.lt.s32.totalorder %v1410, 4
      %v1433 = vsel %vm1429, %v1413, %v1416
      %v1434 = vsel %vm1432, %v1422, 2102212464
      %v1435 = vsel %vm1431, %v1419, %v1434
      %v1436 = vsel %vm1430, %v1433, %v1435
      %v1437 = vsel %vm1429, %v1416, %v1419
      %v1438 = vsel %vm1432, %v1425, 920167782
      %v1439 = vsel %vm1431, %v1422, %v1438
      %v1440 = vsel %vm1430, %v1437, %v1439
      %v1441 = vsel %vm1429, %v1419, %v1422
      %v1442 = vsel %vm1432, %v1428, 1326507024
      %v1443 = vsel %vm1431, %v1425, %v1442
      %v1444 = vsel %vm1430, %v1441, %v1443
      %v1445 = vshll.u32 %v1405, 8
      %v1446 = vand.u32 %v1445, 65535
      %v1447 = vshrl.u32 %v1445, 16
      %v1448 = vand.u32 %v1444, 65535
      %v1449 = vshrl.u32 %v1444, 16
      %v1450 = vmul.u32 %v1446, %v1448
      %v1451 = vmul.u32 %v1446, %v1449
      %v1452 = vmul.u32 %v1447, %v1448
      %v1453 = vmul.u32 %v1447, %v1449
      %v1454 = vshll.u32 %v1451, 16
      %v1455 = vshrl.u32 %v1451, 16
      %v1456 = vshll.u32 %v1452, 16
      %v1457 = vshrl.u32 %v1452, 16
      %vm1458 = vc.u32 %v1450, %v1454
      %v1459 = vsel %vm1458, 1, 0
      %v1460 = vadd.s32 %v1450, %v1454
      %v1461 = vadd.s32 %v1453, %v1459
      %vm1462 = vc.u32 %v1460, %v1456
      %v1463 = vsel %vm1462, 1, 0
      %v1464 = vadd.s32 %v1460, %v1456
      %v1465 = vadd.s32 %v1461, %v1463
      %v1466 = vadd.s32 %v1465, %v1455
      %v1467 = vadd.s32 %v1466, %v1457
      %v1468 = vand.u32 %v1445, 65535
      %v1469 = vshrl.u32 %v1445, 16
      %v1470 = vand.u32 %v1440, 65535
      %v1471 = vshrl.u32 %v1440, 16
      %v1472 = vmul.u32 %v1468, %v1470
      %v1473 = vmul.u32 %v1468, %v1471
      %v1474 = vmul.u32 %v1469, %v1470
      %v1475 = vmul.u32 %v1469, %v1471
      %v1476 = vshll.u32 %v1473, 16
      %v1477 = vshrl.u32 %v1473, 16
      %v1478 = vshll.u32 %v1474, 16
      %v1479 = vshrl.u32 %v1474, 16
      %vm1480 = vc.u32 %v1472, %v1476
      %v1481 = vsel %vm1480, 1, 0
      %v1482 = vadd.s32 %v1472, %v1476
      %v1483 = vadd.s32 %v1475, %v1481
      %vm1484 = vc.u32 %v1482, %v1478
      %v1485 = vsel %vm1484, 1, 0
      %v1486 = vadd.s32 %v1482, %v1478
      %v1487 = vadd.s32 %v1483, %v1485
      %v1488 = vadd.s32 %v1487, %v1477
      %v1489 = vadd.s32 %v1488, %v1479
      %v1490 = vmul.u32 %v1445, %v1436
      %v1491 = vadd.s32 %v1467, %v1486
      %vm1492 = vc.u32 %v1467, %v1486
      %v1493 = vadd.s32 %v1489, 1
      %v1494 = vsel %vm1492, %v1493, %v1489
      %v1495 = vadd.s32 %v1490, %v1494
      %v1496 = vadd.s32 %v1495, 536870912
      %v1497 = vshrl.u32 %v1496, 30
      %v1498 = vshll.u32 %v1497, 30
      %v1499 = vsub.s32 %v1495, %v1498
      %vm1500 = vcmp.lt.s32.totalorder %v1499, 0
      %v1501 = vsub.s32 0, %v1499
      %v1502 = vsel %vm1500, %v1501, %v1499
      %v1503 = vclz %v1502
      %v1504 = vsub.s32 %v1503, 2
      %vm1505 = vcmp.gt.s32.totalorder 0, %v1504
      %v1506 = vsel %vm1505, 0, %v1504
      %v1507 = vsub.s32 32, %v1506
      %v1508 = vshll.u32 %v1499, %v1506
      %v1509 = vshrl.u32 %v1491, %v1507
      %v1510 = vor.u32 %v1508, %v1509
      %v1511 = vsub.s32 4294967266, %v1506
      %v1512 = vadd.s32 %v1511, 127
      %v1513 = vshll.u32 %v1512, 23
      %v1514 = vor.u32 4788187, %v1513
      %v1515 = vand.u32 2147483647, %v1514
      %v1517 = vcvt.s32.f32 %v1510
      %v1518 = vmul.f32 %v1517, %v1515
      %v1519 = vxor.u32 %v1518, 2147483648
      %v1520 = vsel %vm1399, %v1519, %v1518
      %v1521 = vsub.s32 4, %v1497
      %v1522 = vsel %vm1399, %v1521, %v1497
      %v1523 = vsel %vm1398, %v1240, %v1520
      %v1524 = vsel %vm1398, 0, %v1522
      %v1525 = vmul.f32 %v1523, %v1523
      %v1526 = vmul.f32 %v1525, -0.001358992
      %v1527 = vadd.f32 %v1526, 0.041655596
      %v1528 = vmul.f32 %v1525, %v1527
      %v1529 = vadd.f32 %v1528, -0.4999988
      %v1530 = vmul.f32 %v1525, %v1529
      %v1531 = vadd.f32 1.0, %v1530
      %v1532 = vmul.f32 %v1523, %v1523
      %v1533 = vmul.f32 %v1532, -0.00019511016
      %v1534 = vadd.f32 %v1533, 0.008332121
      %v1535 = vmul.f32 %v1532, %v1534
      %v1536 = vadd.f32 %v1535, -0.16666654
      %v1537 = vmul.f32 %v1532, %v1536
      %v1538 = vadd.f32 %v1537, 1.0
      %v1539 = vmul.f32 %v1538, %v1523
      %vm1540 = vweird.f32 %v1240
      %v1541 = vand.u32 %v1524, 3
      %vm1542 = vcmp.lt.s32.totalorder %v1541, 2
      %vm1543 = vcmp.eq.s32.totalorder %v1541, 0
      %v1544 = vxor.u32 %v1539, 2147483648
      %v1545 = vsel %vm1543, %v1531, %v1544
      %vm1546 = vcmp.eq.s32.totalorder %v1541, 2
      %v1547 = vxor.u32 %v1531, 2147483648
      %v1548 = vsel %vm1546, %v1547, %v1539
      %v1549 = vsel %vm1542, %v1545, %v1548
      %v1550 = vsel %vm1540, nan, %v1549
      %v1551 = vand.u32 2147483647, %v1241
      %vm1552 = vcmp.le.f32.partialorder %v1551, 0.7853982
      %vm1553 = vcmp.lt.s32.totalorder %v1241, 0
      %v1554 = vand.u32 %v1241, 2139095040
      %v1555 = vshrl.u32 %v1554, 23
      %v1556 = vsub.s32 %v1555, 127
      %v1557 = vand.u32 2147483647, %v1241
      %v1558 = vand.u32 %v1557, 8388607
      %v1559 = vor.u32 %v1558, 8388608
      %v1560 = vsub.s32 0, %v1559
      %v1561 = vadd.s32 %v1556, 1
      %vm1562 = vcmp.gt.s32.totalorder %v1561, 0
      %v1563 = vsel %vm1562, %v1561, 0
      %v1564 = vshrl.u32 %v1563, 5
      %v1565 = vand.u32 %v1563, 31
      %v1566 = vsub.s32 32, %v1565
      %v1567 = vshrl.u32 683565275, %v1566
      %v1568 = vshll.u32 683565275, %v1565
      %v1569 = vshrl.u32 2475754826, %v1566
      %v1570 = vor.u32 %v1568, %v1569
      %v1571 = vshll.u32 2475754826, %v1565
      %v1572 = vshrl.u32 2131351028, %v1566
      %v1573 = vor.u32 %v1571, %v1572
      %v1574 = vshll.u32 2131351028, %v1565
      %v1575 = vshrl.u32 2102212464, %v1566
      %v1576 = vor.u32 %v1574, %v1575
      %v1577 = vshll.u32 2102212464, %v1565
      %v1578 = vshrl.u32 920167782, %v1566
      %v1579 = vor.u32 %v1577, %v1578
      %v1580 = vshll.u32 920167782, %v1565
      %v1581 = vshrl.u32 1326507024, %v1566
      %v1582 = vor.u32 %v1580, %v1581
      %vm1583 = vcmp.lt.s32.totalorder %v1564, 1
      %vm1584 = vcmp.lt.s32.totalorder %v1564, 2
      %vm1585 = vcmp.lt.s32.totalorder %v1564, 3
      %vm1586 = vcmp.lt.s32.totalorder %v1564, 4
      %v1587 = vsel %vm1583, %v1567, %v1570
      %v1588 = vsel %vm1586, %v1576, 2102212464
      %v1589 = vsel %vm1585, %v1573, %v1588
      %v1590 = vsel %vm1584, %v1587, %v1589
      %v1591 = vsel %vm1583, %v1570, %v1573
      %v1592 = vsel %vm1586, %v1579, 920167782
      %v1593 = vsel %vm1585, %v1576, %v1592
      %v1594 = vsel %vm1584, %v1591, %v1593
      %v1595 = vsel %vm1583, %v1573, %v1576
      %v1596 = vsel %vm1586, %v1582, 1326507024
      %v1597 = vsel %vm1585, %v1579, %v1596
      %v1598 = vsel %vm1584, %v1595, %v1597
      %v1599 = vshll.u32 %v1559, 8
      %v1600 = vand.u32 %v1599, 65535
      %v1601 = vshrl.u32 %v1599, 16
      %v1602 = vand.u32 %v1598, 65535
      %v1603 = vshrl.u32 %v1598, 16
      %v1604 = vmul.u32 %v1600, %v1602
      %v1605 = vmul.u32 %v1600, %v1603
      %v1606 = vmul.u32 %v1601, %v1602
      %v1607 = vmul.u32 %v1601, %v1603
      %v1608 = vshll.u32 %v1605, 16
      %v1609 = vshrl.u32 %v1605, 16
      %v1610 = vshll.u32 %v1606, 16
      %v1611 = vshrl.u32 %v1606, 16
      %vm1612 = vc.u32 %v1604, %v1608
      %v1613 = vsel %vm1612, 1, 0
      %v1614 = vadd.s32 %v1604, %v1608
      %v1615 = vadd.s32 %v1607, %v1613
      %vm1616 = vc.u32 %v1614, %v1610
      %v1617 = vsel %vm1616, 1, 0
      %v1618 = vadd.s32 %v1614, %v1610
      %v1619 = vadd.s32 %v1615, %v1617
      %v1620 = vadd.s32 %v1619, %v1609
      %v1621 = vadd.s32 %v1620, %v1611
      %v1622 = vand.u32 %v1599, 65535
      %v1623 = vshrl.u32 %v1599, 16
      %v1624 = vand.u32 %v1594, 65535
      %v1625 = vshrl.u32 %v1594, 16
      %v1626 = vmul.u32 %v1622, %v1624
      %v1627 = vmul.u32 %v1622, %v1625
      %v1628 = vmul.u32 %v1623, %v1624
      %v1629 = vmul.u32 %v1623, %v1625
      %v1630 = vshll.u32 %v1627, 16
      %v1631 = vshrl.u32 %v1627, 16
      %v1632 = vshll.u32 %v1628, 16
      %v1633 = vshrl.u32 %v1628, 16
      %vm1634 = vc.u32 %v1626, %v1630
      %v1635 = vsel %vm1634, 1, 0
      %v1636 = vadd.s32 %v1626, %v1630
      %v1637 = vadd.s32 %v1629, %v1635
      %vm1638 = vc.u32 %v1636, %v1632
      %v1639 = vsel %vm1638, 1, 0
      %v1640 = vadd.s32 %v1636, %v1632
      %v1641 = vadd.s32 %v1637, %v1639
      %v1642 = vadd.s32 %v1641, %v1631
      %v1643 = vadd.s32 %v1642, %v1633
      %v1644 = vmul.u32 %v1599, %v1590
      %v1645 = vadd.s32 %v1621, %v1640
      %vm1646 = vc.u32 %v1621, %v1640
      %v1647 = vadd.s32 %v1643, 1
      %v1648 = vsel %vm1646, %v1647, %v1643
      %v1649 = vadd.s32 %v1644, %v1648
      %v1650 = vadd.s32 %v1649, 536870912
      %v1651 = vshrl.u32 %v1650, 30
      %v1652 = vshll.u32 %v1651, 30
      %v1653 = vsub.s32 %v1649, %v1652
      %vm1654 = vcmp.lt.s32.totalorder %v1653, 0
      %v1655 = vsub.s32 0, %v1653
      %v1656 = vsel %vm1654, %v1655, %v1653
      %v1657 = vclz %v1656
      %v1658 = vsub.s32 %v1657, 2
      %vm1659 = vcmp.gt.s32.totalorder 0, %v1658
      %v1660 = vsel %vm1659, 0, %v1658
      %v1661 = vsub.s32 32, %v1660
      %v1662 = vshll.u32 %v1653, %v1660
      %v1663 = vshrl.u32 %v1645, %v1661
      %v1664 = vor.u32 %v1662, %v1663
      %v1665 = vsub.s32 4294967266, %v1660
      %v1666 = vadd.s32 %v1665, 127
      %v1667 = vshll.u32 %v1666, 23
      %v1668 = vor.u32 4788187, %v1667
      %v1669 = vand.u32 2147483647, %v1668
      %v1671 = vcvt.s32.f32 %v1664
      %v1672 = vmul.f32 %v1671, %v1669
      %v1673 = vxor.u32 %v1672, 2147483648
      %v1674 = vsel %vm1553, %v1673, %v1672
      %v1675 = vsub.s32 4, %v1651
      %v1676 = vsel %vm1553, %v1675, %v1651
      %v1677 = vsel %vm1552, %v1241, %v1674
      %v1678 = vsel %vm1552, 0, %v1676
      %v1679 = vmul.f32 %v1677, %v1677
      %v1680 = vmul.f32 %v1679, -0.001358992
      %v1681 = vadd.f32 %v1680, 0.041655596
      %v1682 = vmul.f32 %v1679, %v1681
      %v1683 = vadd.f32 %v1682, -0.4999988
      %v1684 = vmul.f32 %v1679, %v1683
      %v1685 = vadd.f32 1.0, %v1684
      %v1686 = vmul.f32 %v1677, %v1677
      %v1687 = vmul.f32 %v1686, -0.00019511016
      %v1688 = vadd.f32 %v1687, 0.008332121
      %v1689 = vmul.f32 %v1686, %v1688
      %v1690 = vadd.f32 %v1689, -0.16666654
      %v1691 = vmul.f32 %v1686, %v1690
      %v1692 = vadd.f32 %v1691, 1.0
      %v1693 = vmul.f32 %v1692, %v1677
      %vm1694 = vweird.f32 %v1241
      %v1695 = vand.u32 %v1678, 3
      %vm1696 = vcmp.lt.s32.totalorder %v1695, 2
      %vm1697 = vcmp.eq.s32.totalorder %v1695, 0
      %v1698 = vxor.u32 %v1693, 2147483648
      %v1699 = vsel %vm1697, %v1685, %v1698
      %vm1700 = vcmp.eq.s32.totalorder %v1695, 2
      %v1701 = vxor.u32 %v1685, 2147483648
      %v1702 = vsel %vm1700, %v1701, %v1693
      %v1703 = vsel %vm1696, %v1699, %v1702
      %v1704 = vsel %vm1694, nan, %v1703
      %v1705 = vand.u32 2147483647, %v1242
      %vm1706 = vcmp.le.f32.partialorder %v1705, 0.7853982
      %vm1707 = vcmp.lt.s32.totalorder %v1242, 0
      %v1708 = vand.u32 %v1242, 2139095040
      %v1709 = vshrl.u32 %v1708, 23
      %v1710 = vsub.s32 %v1709, 127
      %v1711 = vand.u32 2147483647, %v1242
      %v1712 = vand.u32 %v1711, 8388607
      %v1713 = vor.u32 %v1712, 8388608
      %v1714 = vsub.s32 0, %v1713
      %v1715 = vadd.s32 %v1710, 1
      %vm1716 = vcmp.gt.s32.totalorder %v1715, 0
      %v1717 = vsel %vm1716, %v1715, 0
      %v1718 = vshrl.u32 %v1717, 5
      %v1719 = vand.u32 %v1717, 31
      %v1720 = vsub.s32 32, %v1719
      %v1721 = vshrl.u32 683565275, %v1720
      %v1722 = vshll.u32 683565275, %v1719
      %v1723 = vshrl.u32 2475754826, %v1720
      %v1724 = vor.u32 %v1722, %v1723
      %v1725 = vshll.u32 2475754826, %v1719
      %v1726 = vshrl.u32 2131351028, %v1720
      %v1727 = vor.u32 %v1725, %v1726
      %v1728 = vshll.u32 2131351028, %v1719
      %v1729 = vshrl.u32 2102212464, %v1720
      %v1730 = vor.u32 %v1728, %v1729
      %v1731 = vshll.u32 2102212464, %v1719
      %v1732 = vshrl.u32 920167782, %v1720
      %v1733 = vor.u32 %v1731, %v1732
      %v1734 = vshll.u32 920167782, %v1719
      %v1735 = vshrl.u32 1326507024, %v1720
      %v1736 = vor.u32 %v1734, %v1735
      %vm1737 = vcmp.lt.s32.totalorder %v1718, 1
      %vm1738 = vcmp.lt.s32.totalorder %v1718, 2
      %vm1739 = vcmp.lt.s32.totalorder %v1718, 3
      %vm1740 = vcmp.lt.s32.totalorder %v1718, 4
      %v1741 = vsel %vm1737, %v1721, %v1724
      %v1742 = vsel %vm1740, %v1730, 2102212464
      %v1743 = vsel %vm1739, %v1727, %v1742
      %v1744 = vsel %vm1738, %v1741, %v1743
      %v1745 = vsel %vm1737, %v1724, %v1727
      %v1746 = vsel %vm1740, %v1733, 920167782
      %v1747 = vsel %vm1739, %v1730, %v1746
      %v1748 = vsel %vm1738, %v1745, %v1747
      %v1749 = vsel %vm1737, %v1727, %v1730
      %v1750 = vsel %vm1740, %v1736, 1326507024
      %v1751 = vsel %vm1739, %v1733, %v1750
      %v1752 = vsel %vm1738, %v1749, %v1751
      %v1753 = vshll.u32 %v1713, 8
      %v1754 = vand.u32 %v1753, 65535
      %v1755 = vshrl.u32 %v1753, 16
      %v1756 = vand.u32 %v1752, 65535
      %v1757 = vshrl.u32 %v1752, 16
      %v1758 = vmul.u32 %v1754, %v1756
      %v1759 = vmul.u32 %v1754, %v1757
      %v1760 = vmul.u32 %v1755, %v1756
      %v1761 = vmul.u32 %v1755, %v1757
      %v1762 = vshll.u32 %v1759, 16
      %v1763 = vshrl.u32 %v1759, 16
      %v1764 = vshll.u32 %v1760, 16
      %v1765 = vshrl.u32 %v1760, 16
      %vm1766 = vc.u32 %v1758, %v1762
      %v1767 = vsel %vm1766, 1, 0
      %v1768 = vadd.s32 %v1758, %v1762
      %v1769 = vadd.s32 %v1761, %v1767
      %vm1770 = vc.u32 %v1768, %v1764
      %v1771 = vsel %vm1770, 1, 0
      %v1772 = vadd.s32 %v1768, %v1764
      %v1773 = vadd.s32 %v1769, %v1771
      %v1774 = vadd.s32 %v1773, %v1763
      %v1775 = vadd.s32 %v1774, %v1765
      %v1776 = vand.u32 %v1753, 65535
      %v1777 = vshrl.u32 %v1753, 16
      %v1778 = vand.u32 %v1748, 65535
      %v1779 = vshrl.u32 %v1748, 16
      %v1780 = vmul.u32 %v1776, %v1778
      %v1781 = vmul.u32 %v1776, %v1779
      %v1782 = vmul.u32 %v1777, %v1778
      %v1783 = vmul.u32 %v1777, %v1779
      %v1784 = vshll.u32 %v1781, 16
      %v1785 = vshrl.u32 %v1781, 16
      %v1786 = vshll.u32 %v1782, 16
      %v1787 = vshrl.u32 %v1782, 16
      %vm1788 = vc.u32 %v1780, %v1784
      %v1789 = vsel %vm1788, 1, 0
      %v1790 = vadd.s32 %v1780, %v1784
      %v1791 = vadd.s32 %v1783, %v1789
      %vm1792 = vc.u32 %v1790, %v1786
      %v1793 = vsel %vm1792, 1, 0
      %v1794 = vadd.s32 %v1790, %v1786
      %v1795 = vadd.s32 %v1791, %v1793
      %v1796 = vadd.s32 %v1795, %v1785
      %v1797 = vadd.s32 %v1796, %v1787
      %v1798 = vmul.u32 %v1753, %v1744
      %v1799 = vadd.s32 %v1775, %v1794
      %vm1800 = vc.u32 %v1775, %v1794
      %v1801 = vadd.s32 %v1797, 1
      %v1802 = vsel %vm1800, %v1801, %v1797
      %v1803 = vadd.s32 %v1798, %v1802
      %v1804 = vadd.s32 %v1803, 536870912
      %v1805 = vshrl.u32 %v1804, 30
      %v1806 = vshll.u32 %v1805, 30
      %v1807 = vsub.s32 %v1803, %v1806
      %vm1808 = vcmp.lt.s32.totalorder %v1807, 0
      %v1809 = vsub.s32 0, %v1807
      %v1810 = vsel %vm1808, %v1809, %v1807
      %v1811 = vclz %v1810
      %v1812 = vsub.s32 %v1811, 2
      %vm1813 = vcmp.gt.s32.totalorder 0, %v1812
      %v1814 = vsel %vm1813, 0, %v1812
      %v1815 = vsub.s32 32, %v1814
      %v1816 = vshll.u32 %v1807, %v1814
      %v1817 = vshrl.u32 %v1799, %v1815
      %v1818 = vor.u32 %v1816, %v1817
      %v1819 = vsub.s32 4294967266, %v1814
      %v1820 = vadd.s32 %v1819, 127
      %v1821 = vshll.u32 %v1820, 23
      %v1822 = vor.u32 4788187, %v1821
      %v1823 = vand.u32 2147483647, %v1822
      %v1825 = vcvt.s32.f32 %v1818
      %v1826 = vmul.f32 %v1825, %v1823
      %v1827 = vxor.u32 %v1826, 2147483648
      %v1828 = vsel %vm1707, %v1827, %v1826
      %v1829 = vsub.s32 4, %v1805
      %v1830 = vsel %vm1707, %v1829, %v1805
      %v1831 = vsel %vm1706, %v1242, %v1828
      %v1832 = vsel %vm1706, 0, %v1830
      %v1833 = vmul.f32 %v1831, %v1831
      %v1834 = vmul.f32 %v1833, -0.001358992
      %v1835 = vadd.f32 %v1834, 0.041655596
      %v1836 = vmul.f32 %v1833, %v1835
      %v1837 = vadd.f32 %v1836, -0.4999988
      %v1838 = vmul.f32 %v1833, %v1837
      %v1839 = vadd.f32 1.0, %v1838
      %v1840 = vmul.f32 %v1831, %v1831
      %v1841 = vmul.f32 %v1840, -0.00019511016
      %v1842 = vadd.f32 %v1841, 0.008332121
      %v1843 = vmul.f32 %v1840, %v1842
      %v1844 = vadd.f32 %v1843, -0.16666654
      %v1845 = vmul.f32 %v1840, %v1844
      %v1846 = vadd.f32 %v1845, 1.0
      %v1847 = vmul.f32 %v1846, %v1831
      %vm1848 = vweird.f32 %v1242
      %v1849 = vand.u32 %v1832, 3
      %vm1850 = vcmp.lt.s32.totalorder %v1849, 2
      %vm1851 = vcmp.eq.s32.totalorder %v1849, 0
      %v1852 = vxor.u32 %v1847, 2147483648
      %v1853 = vsel %vm1851, %v1839, %v1852
      %vm1854 = vcmp.eq.s32.totalorder %v1849, 2
      %v1855 = vxor.u32 %v1839, 2147483648
      %v1856 = vsel %vm1854, %v1855, %v1847
      %v1857 = vsel %vm1850, %v1853, %v1856
      %v1858 = vsel %vm1848, nan, %v1857
      %v1859 = vpack.c.bf16 %v1550, %v1396
      %v1860 = vpack.c.bf16 %v1858, %v1704
      %1861 = vst [vmem:[#allocation2 + $0x30] sm:$0xff] %v1859
      %1862 = vst [vmem:[#allocation2 + $0x38] sm:$0xff] %v1860
      %v1863 = vld [vmem:[%s5] sm:$0xf]
      %v1864 = vld [vmem:[%s5 + $0x4] sm:$0xf]
      %v1865 = vld [vmem:[%s5 + $0x8] sm:$0xf]
      %v1866 = vld [vmem:[%s5 + $0xc] sm:$0xf]
      %v1867 = vld [vmem:[%s5 + $0x10] sm:$0xf]
      %v1868 = vld [vmem:[%s5 + $0x14] sm:$0xf]
      %v1869 = vld [vmem:[%s5 + $0x18] sm:$0xf]
      %v1870 = vld [vmem:[%s5 + $0x1c] sm:$0xf]
      %v1871 = vld [vmem:[#allocation2] sm:$0xff]
      %v1872 = vld [vmem:[#allocation2 + $0x8] sm:$0xff]
      %v1873 = vld [vmem:[#allocation2 + $0x10] sm:$0xff]
      %v1874 = vld [vmem:[#allocation2 + $0x18] sm:$0xff]
      %v1875 = vld [vmem:[#allocation2 + $0x20] sm:$0xff]
      %v1876 = vld [vmem:[#allocation2 + $0x28] sm:$0xff]
      %v1877 = vld [vmem:[#allocation2 + $0x30] sm:$0xff]
      %v1878 = vld [vmem:[#allocation2 + $0x38] sm:$0xff]
      %v1879 = vld [vmem:[%s6] sm:$0xff]
      %v1880 = vld [vmem:[%s6 + $0x8] sm:$0xff]
      %v1881 = vld [vmem:[%s6 + $0x10] sm:$0xff]
      %v1882 = vld [vmem:[%s6 + $0x18] sm:$0xff]
      %v1883 = vld [vmem:[%s6 + $0x20] sm:$0xff]
      %v1884 = vld [vmem:[%s6 + $0x28] sm:$0xff]
      %v1885 = vld [vmem:[%s6 + $0x30] sm:$0xff]
      %v1886 = vld [vmem:[%s6 + $0x38] sm:$0xff]
      %1888 = vset.pattern.permute.xlu0 0
      %1889 = vperm.xlu0 %1888, %v1879
      %v1890 = vpop.permute.xlu0 %1889
      %1893 = vset.pattern.permute.xlu0 0
      %1894 = vperm.xlu0 %1893, %v1880
      %v1895 = vpop.permute.xlu0 %1894
      %1898 = vset.pattern.permute.xlu0 0
      %1899 = vperm.xlu0 %1898, %v1881
      %v1900 = vpop.permute.xlu0 %1899
      %1903 = vset.pattern.permute.xlu0 0
      %1904 = vperm.xlu0 %1903, %v1882
      %v1905 = vpop.permute.xlu0 %1904
      %1908 = vset.pattern.permute.xlu0 0
      %1909 = vperm.xlu0 %1908, %v1883
      %v1910 = vpop.permute.xlu0 %1909
      %1913 = vset.pattern.permute.xlu0 0
      %1914 = vperm.xlu0 %1913, %v1884
      %v1915 = vpop.permute.xlu0 %1914
      %1918 = vset.pattern.permute.xlu0 0
      %1919 = vperm.xlu0 %1918, %v1885
      %v1920 = vpop.permute.xlu0 %1919
      %1923 = vset.pattern.permute.xlu0 0
      %1924 = vperm.xlu0 %1923, %v1886
      %v1925 = vpop.permute.xlu0 %1924
      %v1935 = vunpack.c.l.b16 %v1863
      %v1936 = vunpack.c.l.b16 %v1864
      %v1937 = vunpack.c.l.b16 %v1865
      %v1938 = vunpack.c.l.b16 %v1866
      %v1939 = vunpack.c.l.b16 %v1867
      %v1940 = vunpack.c.l.b16 %v1868
      %v1941 = vunpack.c.l.b16 %v1869
      %v1942 = vunpack.c.l.b16 %v1870
      %v1943 = vpack.c.b16 %v1936, %v1935
      %v1944 = vpack.c.b16 %v1938, %v1937
      %v1945 = vpack.c.b16 %v1940, %v1939
      %v1946 = vpack.c.b16 %v1942, %v1941
      %v1955 = vunpack.c.l.b16 %v1871
      %v1956 = vunpack.c.h.b16 %v1871
      %v1957 = vunpack.c.l.b16 %v1872
      %v1958 = vunpack.c.h.b16 %v1872
      %v1959 = vunpack.c.l.b16 %v1873
      %v1960 = vunpack.c.h.b16 %v1873
      %v1961 = vunpack.c.l.b16 %v1874
      %v1962 = vunpack.c.h.b16 %v1874
      %v1963 = vunpack.c.l.b16 %v1875
      %v1964 = vunpack.c.h.b16 %v1875
      %v1965 = vunpack.c.l.b16 %v1876
      %v1966 = vunpack.c.h.b16 %v1876
      %v1967 = vunpack.c.l.b16 %v1877
      %v1968 = vunpack.c.h.b16 %v1877
      %v1969 = vunpack.c.l.b16 %v1878
      %v1970 = vunpack.c.h.b16 %v1878
      %v1971 = vpack.c.b16 %v1957, %v1955
      %v1972 = vpack.c.b16 %v1958, %v1956
      %v1973 = vpack.c.b16 %v1961, %v1959
      %v1974 = vpack.c.b16 %v1962, %v1960
      %v1975 = vpack.c.b16 %v1965, %v1963
      %v1976 = vpack.c.b16 %v1966, %v1964
      %v1977 = vpack.c.b16 %v1969, %v1967
      %v1978 = vpack.c.b16 %v1970, %v1968
      %vm1987 = vcmask 523264
      %v1989 = vsel %vm1987, %v1943, 0
      %v1992 = vsel %vm1987, %v1944, 0
      %v1995 = vsel %vm1987, %v1945, 0
      %v1998 = vsel %vm1987, %v1946, 0
      %2000 = vmatpush.bf16.msra.mxu0 0
      %2001 = vmatpush.bf16.msra.mxu0 0
      %2002 = vmatpush.bf16.msra.mxu0 0
      %2003 = vmatpush.bf16.msra.mxu0 0
      %2004 = vmatpush.bf16.msra.mxu0 %v1977
      %2005 = vmatpush.bf16.msra.mxu0 %v1975
      %2006 = vmatpush.bf16.msra.mxu0 %v1973
      %2007 = vmatpush.bf16.msra.mxu0 %v1971
      %2008 = vmatmul.bf16.gmra.mxu0 %v1989
      %v2009 = vpop.f32.mrf.mxu0
      %v2010 = vadd.f32 %v1890, %v2009
      %v2011 = vpop.f32.mrf.mxu0
      %v2012 = vadd.f32 %v1895, %v2011
      %2013 = vmatmul.bf16.gmra.mxu0 %v1992
      %v2014 = vpop.f32.mrf.mxu0
      %v2015 = vadd.f32 %v1900, %v2014
      %v2016 = vpop.f32.mrf.mxu0
      %v2017 = vadd.f32 %v1905, %v2016
      %2018 = vmatmul.bf16.gmra.mxu0 %v1995
      %v2019 = vpop.f32.mrf.mxu0
      %v2020 = vadd.f32 %v1910, %v2019
      %v2021 = vpop.f32.mrf.mxu0
      %v2022 = vadd.f32 %v1915, %v2021
      %2023 = vmatmul.bf16.gmra.mxu0 %v1998
      %v2024 = vpop.f32.mrf.mxu0
      %v2025 = vadd.f32 %v1920, %v2024
      %v2026 = vpop.f32.mrf.mxu0
      %v2027 = vadd.f32 %v1925, %v2026
      %2028 = vdwg.mxu0
      %2029 = vmatpush.bf16.msra.mxu0 0
      %2030 = vmatpush.bf16.msra.mxu0 0
      %2031 = vmatpush.bf16.msra.mxu0 0
      %2032 = vmatpush.bf16.msra.mxu0 0
      %2033 = vmatpush.bf16.msra.mxu0 %v1978
      %2034 = vmatpush.bf16.msra.mxu0 %v1976
      %2035 = vmatpush.bf16.msra.mxu0 %v1974
      %2036 = vmatpush.bf16.msra.mxu0 %v1972
      %2037 = vmatmul.bf16.gmra.mxu0 %v1989
      %v2038 = vpop.f32.mrf.mxu0
      %v2039 = vadd.f32 %v1890, %v2038
      %v2040 = vpop.f32.mrf.mxu0
      %v2041 = vadd.f32 %v1895, %v2040
      %2042 = vmatmul.bf16.gmra.mxu0 %v1992
      %v2043 = vpop.f32.mrf.mxu0
      %v2044 = vadd.f32 %v1900, %v2043
      %v2045 = vpop.f32.mrf.mxu0
      %v2046 = vadd.f32 %v1905, %v2045
      %2047 = vmatmul.bf16.gmra.mxu0 %v1995
      %v2048 = vpop.f32.mrf.mxu0
      %v2049 = vadd.f32 %v1910, %v2048
      %v2050 = vpop.f32.mrf.mxu0
      %v2051 = vadd.f32 %v1915, %v2050
      %2052 = vmatmul.bf16.gmra.mxu0 %v1998
      %v2053 = vpop.f32.mrf.mxu0
      %v2054 = vadd.f32 %v1920, %v2053
      %v2055 = vpop.f32.mrf.mxu0
      %v2056 = vadd.f32 %v1925, %v2055
      %2057 = vdwg.mxu0
      %v2058 = vmax.f32 %v2010, 0.0
      %v2059 = vmax.f32 %v2039, 0.0
      %v2060 = vmax.f32 %v2012, 0.0
      %v2061 = vmax.f32 %v2041, 0.0
      %v2062 = vmax.f32 %v2015, 0.0
      %v2063 = vmax.f32 %v2044, 0.0
      %v2064 = vmax.f32 %v2017, 0.0
      %v2065 = vmax.f32 %v2046, 0.0
      %v2066 = vmax.f32 %v2020, 0.0
      %v2067 = vmax.f32 %v2049, 0.0
      %v2068 = vmax.f32 %v2022, 0.0
      %v2069 = vmax.f32 %v2051, 0.0
      %v2070 = vmax.f32 %v2025, 0.0
      %v2071 = vmax.f32 %v2054, 0.0
      %v2072 = vmax.f32 %v2027, 0.0
      %v2073 = vmax.f32 %v2056, 0.0
      %v2074 = vld [vmem:[%s7] sm:$0xf]
      %v2075 = vld [vmem:[%s7 + $0x4] sm:$0xf]
      %v2076 = vld [vmem:[%s7 + $0x8] sm:$0xf]
      %v2077 = vld [vmem:[%s7 + $0xc] sm:$0xf]
      %v2078 = vld [vmem:[%s7 + $0x10] sm:$0xf]
      %v2079 = vld [vmem:[%s7 + $0x14] sm:$0xf]
      %v2080 = vld [vmem:[%s7 + $0x18] sm:$0xf]
      %v2081 = vld [vmem:[%s7 + $0x1c] sm:$0xf]
      %v2082 = vpack.c.bf16 %v2060, %v2058
      %v2083 = vpack.c.bf16 %v2061, %v2059
      %v2084 = vpack.c.bf16 %v2064, %v2062
      %v2085 = vpack.c.bf16 %v2065, %v2063
      %v2086 = vpack.c.bf16 %v2068, %v2066
      %v2087 = vpack.c.bf16 %v2069, %v2067
      %v2088 = vpack.c.bf16 %v2072, %v2070
      %v2089 = vpack.c.bf16 %v2073, %v2071
      %v2090 = vld [vmem:[%s8] sm:$0xff]
      %v2091 = vld [vmem:[%s8 + $0x8] sm:$0xff]
      %v2092 = vld [vmem:[%s8 + $0x10] sm:$0xff]
      %v2093 = vld [vmem:[%s8 + $0x18] sm:$0xff]
      %v2094 = vld [vmem:[%s8 + $0x20] sm:$0xff]
      %v2095 = vld [vmem:[%s8 + $0x28] sm:$0xff]
      %v2096 = vld [vmem:[%s8 + $0x30] sm:$0xff]
      %v2097 = vld [vmem:[%s8 + $0x38] sm:$0xff]
      %2099 = vset.pattern.permute.xlu0 0
      %2100 = vperm.xlu0 %2099, %v2090
      %v2101 = vpop.permute.xlu0 %2100
      %2104 = vset.pattern.permute.xlu0 0
      %2105 = vperm.xlu0 %2104, %v2091
      %v2106 = vpop.permute.xlu0 %2105
      %2109 = vset.pattern.permute.xlu0 0
      %2110 = vperm.xlu0 %2109, %v2092
      %v2111 = vpop.permute.xlu0 %2110
      %2114 = vset.pattern.permute.xlu0 0
      %2115 = vperm.xlu0 %2114, %v2093
      %v2116 = vpop.permute.xlu0 %2115
      %2119 = vset.pattern.permute.xlu0 0
      %2120 = vperm.xlu0 %2119, %v2094
      %v2121 = vpop.permute.xlu0 %2120
      %2124 = vset.pattern.permute.xlu0 0
      %2125 = vperm.xlu0 %2124, %v2095
      %v2126 = vpop.permute.xlu0 %2125
      %2129 = vset.pattern.permute.xlu0 0
      %2130 = vperm.xlu0 %2129, %v2096
      %v2131 = vpop.permute.xlu0 %2130
      %2134 = vset.pattern.permute.xlu0 0
      %2135 = vperm.xlu0 %2134, %v2097
      %v2136 = vpop.permute.xlu0 %2135
      %v2146 = vunpack.c.l.b16 %v2074
      %v2147 = vunpack.c.l.b16 %v2075
      %v2148 = vunpack.c.l.b16 %v2076
      %v2149 = vunpack.c.l.b16 %v2077
      %v2150 = vunpack.c.l.b16 %v2078
      %v2151 = vunpack.c.l.b16 %v2079
      %v2152 = vunpack.c.l.b16 %v2080
      %v2153 = vunpack.c.l.b16 %v2081
      %v2154 = vpack.c.b16 %v2147, %v2146
      %v2155 = vpack.c.b16 %v2149, %v2148
      %v2156 = vpack.c.b16 %v2151, %v2150
      %v2157 = vpack.c.b16 %v2153, %v2152
      %v2159 = vsel %vm1987, %v2154, 0
      %v2162 = vsel %vm1987, %v2155, 0
      %v2165 = vsel %vm1987, %v2156, 0
      %v2168 = vsel %vm1987, %v2157, 0
      %2170 = vmatpush.bf16.msra.mxu0 0
      %2171 = vmatpush.bf16.msra.mxu0 0
      %2172 = vmatpush.bf16.msra.mxu0 0
      %2173 = vmatpush.bf16.msra.mxu0 0
      %2174 = vmatpush.bf16.msra.mxu0 %v2088
      %2175 = vmatpush.bf16.msra.mxu0 %v2086
      %2176 = vmatpush.bf16.msra.mxu0 %v2084
      %2177 = vmatpush.bf16.msra.mxu0 %v2082
      %2178 = vmatmul.bf16.gmra.mxu0 %v2159
      %v2179 = vpop.f32.mrf.mxu0
      %v2180 = vadd.f32 %v2101, %v2179
      %v2181 = vpop.f32.mrf.mxu0
      %v2182 = vadd.f32 %v2106, %v2181
      %2183 = vmatmul.bf16.gmra.mxu0 %v2162
      %v2184 = vpop.f32.mrf.mxu0
      %v2185 = vadd.f32 %v2111, %v2184
      %v2186 = vpop.f32.mrf.mxu0
      %v2187 = vadd.f32 %v2116, %v2186
      %2188 = vmatmul.bf16.gmra.mxu0 %v2165
      %v2189 = vpop.f32.mrf.mxu0
      %v2190 = vadd.f32 %v2121, %v2189
      %v2191 = vpop.f32.mrf.mxu0
      %v2192 = vadd.f32 %v2126, %v2191
      %2193 = vmatmul.bf16.gmra.mxu0 %v2168
      %v2194 = vpop.f32.mrf.mxu0
      %v2195 = vadd.f32 %v2131, %v2194
      %v2196 = vpop.f32.mrf.mxu0
      %v2197 = vadd.f32 %v2136, %v2196
      %2198 = vdwg.mxu0
      %2199 = vmatpush.bf16.msra.mxu0 0
      %2200 = vmatpush.bf16.msra.mxu0 0
      %2201 = vmatpush.bf16.msra.mxu0 0
      %2202 = vmatpush.bf16.msra.mxu0 0
      %2203 = vmatpush.bf16.msra.mxu0 %v2089
      %2204 = vmatpush.bf16.msra.mxu0 %v2087
      %2205 = vmatpush.bf16.msra.mxu0 %v2085
      %2206 = vmatpush.bf16.msra.mxu0 %v2083
      %2207 = vmatmul.bf16.gmra.mxu0 %v2159
      %v2208 = vpop.f32.mrf.mxu0
      %v2209 = vadd.f32 %v2101, %v2208
      %v2210 = vpop.f32.mrf.mxu0
      %v2211 = vadd.f32 %v2106, %v2210
      %2212 = vmatmul.bf16.gmra.mxu0 %v2162
      %v2213 = vpop.f32.mrf.mxu0
      %v2214 = vadd.f32 %v2111, %v2213
      %v2215 = vpop.f32.mrf.mxu0
      %v2216 = vadd.f32 %v2116, %v2215
      %2217 = vmatmul.bf16.gmra.mxu0 %v2165
      %v2218 = vpop.f32.mrf.mxu0
      %v2219 = vadd.f32 %v2121, %v2218
      %v2220 = vpop.f32.mrf.mxu0
      %v2221 = vadd.f32 %v2126, %v2220
      %2222 = vmatmul.bf16.gmra.mxu0 %v2168
      %v2223 = vpop.f32.mrf.mxu0
      %v2224 = vadd.f32 %v2131, %v2223
      %v2225 = vpop.f32.mrf.mxu0
      %v2226 = vadd.f32 %v2136, %v2225
      %2227 = vdwg.mxu0
      %v2228 = vmax.f32 %v2180, 0.0
      %v2229 = vmax.f32 %v2209, 0.0
      %v2230 = vmax.f32 %v2182, 0.0
      %v2231 = vmax.f32 %v2211, 0.0
      %v2232 = vmax.f32 %v2185, 0.0
      %v2233 = vmax.f32 %v2214, 0.0
      %v2234 = vmax.f32 %v2187, 0.0
      %v2235 = vmax.f32 %v2216, 0.0
      %v2236 = vmax.f32 %v2190, 0.0
      %v2237 = vmax.f32 %v2219, 0.0
      %v2238 = vmax.f32 %v2192, 0.0
      %v2239 = vmax.f32 %v2221, 0.0
      %v2240 = vmax.f32 %v2195, 0.0
      %v2241 = vmax.f32 %v2224, 0.0
      %v2242 = vmax.f32 %v2197, 0.0
      %v2243 = vmax.f32 %v2226, 0.0
      %v2244 = vld [vmem:[%s9] sm:$0x3]
      %v2245 = vpack.c.bf16 %v2230, %v2228
      %v2246 = vpack.c.bf16 %v2231, %v2229
      %v2247 = vpack.c.bf16 %v2234, %v2232
      %v2248 = vpack.c.bf16 %v2235, %v2233
      %v2249 = vpack.c.bf16 %v2238, %v2236
      %v2250 = vpack.c.bf16 %v2239, %v2237
      %v2251 = vpack.c.bf16 %v2242, %v2240
      %v2252 = vpack.c.bf16 %v2243, %v2241
      %v2253 = vld [vmem:[%s10] sm:$0x7]
      %2255 = vset.pattern.permute.xlu0 0
      %2256 = vperm.xlu0 %2255, %v2253
      %v2257 = vpop.permute.xlu0 %2256
      %v2260 = vsel %vm1987, %v2244, 0
      %2262 = vmatpush.bf16.msra.mxu0 0
      %2263 = vmatpush.bf16.msra.mxu0 0
      %2264 = vmatpush.bf16.msra.mxu0 0
      %2265 = vmatpush.bf16.msra.mxu0 0
      %2266 = vmatpush.bf16.msra.mxu0 %v2251
      %2267 = vmatpush.bf16.msra.mxu0 %v2249
      %2268 = vmatpush.bf16.msra.mxu0 %v2247
      %2269 = vmatpush.bf16.msra.mxu0 %v2245
      %2270 = vmatmul.bf16.gmra.mxu0 %v2260
      %v2271 = vpop.f32.mrf.mxu0
      %v2272 = vadd.f32 %v2257, %v2271
      %v2273 = vpop.f32.mrf.mxu0
      %2274 = vdwg.mxu0
      %2275 = vmatpush.bf16.msra.mxu0 0
      %2276 = vmatpush.bf16.msra.mxu0 0
      %2277 = vmatpush.bf16.msra.mxu0 0
      %2278 = vmatpush.bf16.msra.mxu0 0
      %2279 = vmatpush.bf16.msra.mxu0 %v2252
      %2280 = vmatpush.bf16.msra.mxu0 %v2250
      %2281 = vmatpush.bf16.msra.mxu0 %v2248
      %2282 = vmatpush.bf16.msra.mxu0 %v2246
      %2283 = vmatmul.bf16.gmra.mxu0 %v2260
      %v2284 = vpop.f32.mrf.mxu0
      %v2285 = vadd.f32 %v2257, %v2284
      %v2286 = vpop.f32.mrf.mxu0
      %2287 = vdwg.mxu0
      %v2290 = vrot.slane %v2285, 4
      %vm2291 = vcmask 1043456
      %v2292 = vsel %vm2291, %v2272, %v2290
      %2294 = vst [vmem:[%s496] sm:$0x77] %v2292
      %s2295 = smul.u32 2, %s27
      %p2296 = scmp.lt.s32.totalorder %s26, 1
      %s2297 = scalar_select %p2296, %s26, 1
      %p2298 = scmp.lt.s32.totalorder %s2295, 1
      %s2299 = scalar_select %p2298, %s2295, 1
      %s2300 = smul.addr %s2297, 2
      %s2301 = sadd.s32 %s2299, %s2300
      %s2302 = smul.addr %s2301, 4
      %s2303 = scalar_lea.vmem %s11, %s2302
      // Predicated region
      $region65: #{_liif_forward.1} parent=63 // pred_check
        %p2304 = pneg %p306
      $region66: #{_liif_forward.1} parent=63 // pred_check_branch
        %2306 = sbr.rel (%p2304) target = $region68
      $region67: #{_liif_forward.1} parent=63 // pred_region
        %s2307 = smul.u32 2, %s27
      $region68: #{_liif_forward.1} parent=63 // pred_fallthru
        _
    $region64: #{_liif_forward.1} parent=5 // pred_fallthru
      _
    %p2308 = scmp.le.s32.totalorder 2, %s17
    // Predicated region
    $region69: #{_liif_forward.1} parent=5 // pred_check
      %p2309 = pneg %p2308
    $region70: #{_liif_forward.1} parent=5 // pred_check_branch
      %2311 = sbr.rel (%p2309) target = $region72
    $region71: #{_liif_forward.1} parent=5 // pred_region
      %s2312 = ssub.s32 %s17, 2
      // Predicated region
      $region73: #{_liif_forward.1} parent=71 // pred_check
        %p2313 = pneg %p312
      $region74: #{_liif_forward.1} parent=71 // pred_check_branch
        %2315 = sbr.rel (%p2313) target = $region76
      $region75: #{_liif_forward.1} parent=71 // pred_region
        %s2316 = smul.u32 2, %s29
        %p2317 = scmp.lt.s32.totalorder %s28, 1
        %s2318 = scalar_select %p2317, %s28, 1
        %p2319 = scmp.lt.s32.totalorder %s2316, 1
        %s2320 = scalar_select %p2319, %s2316, 1
        %s2321 = smul.addr %s2318, 2
        %s2322 = sadd.s32 %s2320, %s2321
        %s2323 = smul.addr %s2322, 4
        %s2324 = scalar_lea.vmem %s11, %s2323
      $region76: #{_liif_forward.1} parent=71 // pred_fallthru
        _
    $region72: #{_liif_forward.1} parent=5 // pred_fallthru
      _
  $region6: #{_liif_forward.1} parent=0 // loop_footer
    %s21 = sadd.s32 1, %s17
  $region7: #{_liif_forward.1} parent=0 // loop_footer_branch
    %16 = sbr.rel target = $region3
  $region8: #{_liif_forward.1} parent=0 // loop_exit
    _

</llo_original>
